<compile_context>
chip_gen: v7x
topology: tpu7x:2x2x1
jax: 0.10.0
libtpu: 0.0.40
codegen_flags: <defaults>
</compile_context>

<pallas_src>
import functools

import jax
import jax.numpy as jnp
from jax.experimental import pallas as pl
from jax.experimental.pallas import tpu as pltpu


def _convglu_kernel(x_ref, w_ref, b_ref, o_ref, patch_ref, *, KH, KW, Wp):
    # x_ref:     (Cin, Lx)            flattened padded image (spatial in lanes)
    # w_ref:     (2*Cout, KH*KW*Cin)  matmul-ready weights
    # b_ref:     (2*Cout, 1)          bias
    # o_ref:     (Cout, L)            lane-dense output slab, L = round_up(Ho*Wp, 128)
    # patch_ref: (KH*KW*Cin, L)       VMEM im2col scratch
    Cin = x_ref.shape[0]
    C2 = w_ref.shape[0]
    Cout = C2 // 2
    L = o_ref.shape[1]

    # Build the im2col patch.  Tap (kh, kw) of the conv corresponds to a shift
    # of s = kh*Wp + kw in the row-flattened padded image, so each row block is
    # a contiguous, statically-offset lane slice (no window reshape needed).
    # Static Python loop: every iteration is a load+store with no carried
    # value, so live ranges stay short.
    for kh in range(KH):
        for kw in range(KW):
            t = kh * KW + kw
            s = kh * Wp + kw
            patch_ref[t * Cin:(t + 1) * Cin, :] = x_ref[:, s:s + L]

    # One lane-dense MXU matmul with an f32 accumulator, bias fused into the
    # epilogue.  acc is (2*Cout, L): 8 sublanes x L lanes -> only a few vregs.
    acc = jnp.dot(w_ref[...], patch_ref[...],
                  preferred_element_type=jnp.float32)
    acc = acc + b_ref[...]                      # (2*Cout, 1) broadcast over lanes

    # GLU: sublane split of the dense accumulator; epilogue kept in f32.
    lin = acc[:Cout, :]
    gate = acc[Cout:, :]
    o_ref[...] = (lin * jax.nn.sigmoid(gate)).astype(o_ref.dtype)


def conv_glu(x_nchw, weight, bias, kernel_size=(7, 7), padding=None,
             compute_dtype=None):
    """ConvGLU forward.

    x_nchw : (N, Cin, H, W)  float32
    weight : (2*Cout, Cin, KH, KW)  (PyTorch Conv2d layout)
    bias   : (2*Cout,)
    compute_dtype : optional dtype for the MXU operands (e.g. jnp.bfloat16 on
                    v6e/v7x); accumulation stays in f32.
    returns: (N, Cout, Ho, Wo)  (== (N, Cout, H, W) for the default "same" padding)
    """
    KH, KW = kernel_size
    if padding is None:
        padding = (KH // 2, KW // 2)
    ph, pw = padding

    N, Cin, H, W = x_nchw.shape
    C2 = weight.shape[0]
    Cout = C2 // 2

    Hp, Wp = H + 2 * ph, W + 2 * pw
    Ho, Wo = Hp - KH + 1, Wp - KW + 1              # conv output spatial dims
    L = ((Ho * Wp + 127) // 128) * 128             # lane-dense slab length
    Lx = (KH - 1) * Wp + (KW - 1) + L              # flat input length needed

    # Channels-first, spatial flattened into the lane dimension, zero-padded to Lx.
    x_pad = jnp.pad(x_nchw, ((0, 0), (0, 0), (ph, ph), (pw, pw)))   # (N,Cin,Hp,Wp)
    x_flat = x_pad.reshape(N, Cin, Hp * Wp)
    x_flat = jnp.pad(x_flat, ((0, 0), (0, 0), (0, Lx - Hp * Wp)))   # (N,Cin,Lx)

    # Matmul-ready weight: column order (kh, kw, ci) matches the patch rows.
    w2d = jnp.transpose(weight, (0, 2, 3, 1)).reshape(C2, KH * KW * Cin)
    b2d = bias.reshape(C2, 1).astype(jnp.float32)

    if compute_dtype is not None:                  # bf16 MXU inputs on v6e/v7x
        x_flat = x_flat.astype(compute_dtype)
        w2d = w2d.astype(compute_dtype)

    kernel = functools.partial(_convglu_kernel, KH=KH, KW=KW, Wp=Wp)

    out_flat = pl.pallas_call(
        kernel,
        out_shape=jax.ShapeDtypeStruct((N, Cout, L), x_nchw.dtype),
        grid_spec=pltpu.PrefetchScalarGridSpec(
            num_scalar_prefetch=0,
            grid=(N,),
            in_specs=[
                # One flattened image per grid step (batch dim squeezed out).
                pl.BlockSpec((None, Cin, Lx), lambda n: (n, 0, 0)),
                # Weights / bias resident across the grid.
                pl.BlockSpec((C2, KH * KW * Cin), lambda n: (0, 0)),
                pl.BlockSpec((C2, 1), lambda n: (0, 0)),
            ],
            out_specs=pl.BlockSpec((None, Cout, L), lambda n: (n, 0, 0)),
            scratch_shapes=[pltpu.VMEM((KH * KW * Cin, L), x_flat.dtype)],
        ),
        compiler_params=pltpu.CompilerParams(
            dimension_semantics=("parallel",)),
    )(x_flat, w2d, b2d)

    # Already NCHW: drop the lane-padding tail and the Wp-Wo "wrap" columns.
    out = out_flat[:, :, :Ho * Wp].reshape(N, Cout, Ho, Wp)[:, :, :, :Wo]
    return out


def _conv_glu_ref(x_nchw, weight, bias, kernel_size=(7, 7), padding=None):
    """Pure-JAX reference mirroring the PyTorch module."""
    KH, KW = kernel_size
    if padding is None:
        padding = (KH // 2, KW // 2)
    y = jax.lax.conv_general_dilated(
        x_nchw, weight,
        window_strides=(1, 1),
        padding=((padding[0], padding[0]), (padding[1], padding[1])),
        dimension_numbers=("NCHW", "OIHW", "NCHW"),
    ) + bias.reshape(1, -1, 1, 1)
    ch = y.shape[1]
    return y[:, :ch // 2] * jax.nn.sigmoid(y[:, ch // 2:])


if __name__ == "__main__":
    # Small shapes consistent with the module: batch=2, in_ch=4, out_ch=4, 16x16 spatial.
    N, Cin, Cout, H, W = 2, 4, 4, 16, 16
    KH, KW = 7, 7

    key = jax.random.PRNGKey(0)
    kx, kw_, kb = jax.random.split(key, 3)

    x = jax.random.normal(kx, (N, Cin, H, W), dtype=jnp.float32)

    # Deterministic Conv2d-style init: U(-bound, bound), bound = 1/sqrt(fan_in).
    fan_in = Cin * KH * KW
    bound = 1.0 / (fan_in ** 0.5)
    weight = jax.random.uniform(kw_, (2 * Cout, Cin, KH, KW),
                                minval=-bound, maxval=bound, dtype=jnp.float32)
    bias = jax.random.uniform(kb, (2 * Cout,),
                              minval=-bound, maxval=bound, dtype=jnp.float32)

    out = conv_glu(x, weight, bias, kernel_size=(KH, KW))
    out = jax.block_until_ready(out)

    ref = _conv_glu_ref(x, weight, bias, kernel_size=(KH, KW))
    assert out.shape == (N, Cout, H, W), out.shape
    assert jnp.allclose(out, ref, atol=1e-4, rtol=1e-4), \
        float(jnp.max(jnp.abs(out - ref)))

    # TODO(synk): batchnorm=False path only; BatchNorm2d variant (running stats) not implemented.
    print("KERNEL_OK")
</pallas_src>

<mosaic_0001>
module attributes {stable_mosaic.version = 11 : i64} {
  func.func @_convglu_kernel(%arg0: i32, %arg1: memref<1x4x522xf32, #tpu.memory_space<vmem>>, %arg2: memref<8x196xf32, #tpu.memory_space<vmem>>, %arg3: memref<8x1xf32, #tpu.memory_space<vmem>>, %arg4: memref<1x4x384xf32, #tpu.memory_space<vmem>>, %arg5: memref<196x384xf32, #tpu.memory_space<vmem>>) attributes {dimension_semantics = [#tpu.dimension_semantics<parallel>], iteration_bounds = array<i64: 2>, scalar_prefetch = 0 : i64, scratch_operands = 1 : i64, tpu.core_type = #tpu.core_type<tc>, window_params = [{transform_indices = @transform_0, window_bounds = array<i64: 1, 4, 522>}, {pipeline_mode = #tpu.pipeline_mode<synchronous>, transform_indices = @transform_1, window_bounds = array<i64: 8, 196>}, {pipeline_mode = #tpu.pipeline_mode<synchronous>, transform_indices = @transform_2, window_bounds = array<i64: 8, 1>}, {transform_indices = @transform_3, window_bounds = array<i64: 1, 4, 384>}]} {
    %c0 = arith.constant 0 : index
    %c0_0 = arith.constant 0 : index
    %c0_1 = arith.constant 0 : index
    %0 = vector.load %arg1[%c0, %c0_0, %c0_1] : memref<1x4x522xf32, #tpu.memory_space<vmem>>, vector<1x4x384xf32>
    %1 = vector.shape_cast %0 : vector<1x4x384xf32> to vector<4x384xf32>
    %c0_2 = arith.constant 0 : index
    %c0_3 = arith.constant 0 : index
    %2 = vector.load %arg5[%c0_2, %c0_3] : memref<196x384xf32, #tpu.memory_space<vmem>>, vector<4x384xf32>
    tpu.vector_store %arg5[%c0_2, %c0_3], %1 {strides = array<i32>} : memref<196x384xf32, #tpu.memory_space<vmem>>, vector<4x384xf32>,
    %c0_4 = arith.constant 0 : index
    %c0_5 = arith.constant 0 : index
    %c1 = arith.constant 1 : index
    %3 = vector.load %arg1[%c0_4, %c0_5, %c1] : memref<1x4x522xf32, #tpu.memory_space<vmem>>, vector<1x4x384xf32>
    %4 = vector.shape_cast %3 : vector<1x4x384xf32> to vector<4x384xf32>
    %c4 = arith.constant 4 : index
    %c0_6 = arith.constant 0 : index
    %5 = vector.load %arg5[%c4, %c0_6] : memref<196x384xf32, #tpu.memory_space<vmem>>, vector<4x384xf32>
    tpu.vector_store %arg5[%c4, %c0_6], %4 {strides = array<i32>} : memref<196x384xf32, #tpu.memory_space<vmem>>, vector<4x384xf32>,
    %c0_7 = arith.constant 0 : index
    %c0_8 = arith.constant 0 : index
    %c2 = arith.constant 2 : index
    %6 = vector.load %arg1[%c0_7, %c0_8, %c2] : memref<1x4x522xf32, #tpu.memory_space<vmem>>, vector<1x4x384xf32>
    %7 = vector.shape_cast %6 : vector<1x4x384xf32> to vector<4x384xf32>
    %c8 = arith.constant 8 : index
    %c0_9 = arith.constant 0 : index
    %8 = vector.load %arg5[%c8, %c0_9] : memref<196x384xf32, #tpu.memory_space<vmem>>, vector<4x384xf32>
    tpu.vector_store %arg5[%c8, %c0_9], %7 {strides = array<i32>} : memref<196x384xf32, #tpu.memory_space<vmem>>, vector<4x384xf32>,
    %c0_10 = arith.constant 0 : index
    %c0_11 = arith.constant 0 : index
    %c3 = arith.constant 3 : index
    %9 = vector.load %arg1[%c0_10, %c0_11, %c3] : memref<1x4x522xf32, #tpu.memory_space<vmem>>, vector<1x4x384xf32>
    %10 = vector.shape_cast %9 : vector<1x4x384xf32> to vector<4x384xf32>
    %c12 = arith.constant 12 : index
    %c0_12 = arith.constant 0 : index
    %11 = vector.load %arg5[%c12, %c0_12] : memref<196x384xf32, #tpu.memory_space<vmem>>, vector<4x384xf32>
    tpu.vector_store %arg5[%c12, %c0_12], %10 {strides = array<i32>} : memref<196x384xf32, #tpu.memory_space<vmem>>, vector<4x384xf32>,
    %c0_13 = arith.constant 0 : index
    %c0_14 = arith.constant 0 : index
    %c4_15 = arith.constant 4 : index
    %12 = vector.load %arg1[%c0_13, %c0_14, %c4_15] : memref<1x4x522xf32, #tpu.memory_space<vmem>>, vector<1x4x384xf32>
    %13 = vector.shape_cast %12 : vector<1x4x384xf32> to vector<4x384xf32>
    %c16 = arith.constant 16 : index
    %c0_16 = arith.constant 0 : index
    %14 = vector.load %arg5[%c16, %c0_16] : memref<196x384xf32, #tpu.memory_space<vmem>>, vector<4x384xf32>
    tpu.vector_store %arg5[%c16, %c0_16], %13 {strides = array<i32>} : memref<196x384xf32, #tpu.memory_space<vmem>>, vector<4x384xf32>,
    %c0_17 = arith.constant 0 : index
    %c0_18 = arith.constant 0 : index
    %c5 = arith.constant 5 : index
    %15 = vector.load %arg1[%c0_17, %c0_18, %c5] : memref<1x4x522xf32, #tpu.memory_space<vmem>>, vector<1x4x384xf32>
    %16 = vector.shape_cast %15 : vector<1x4x384xf32> to vector<4x384xf32>
    %c20 = arith.constant 20 : index
    %c0_19 = arith.constant 0 : index
    %17 = vector.load %arg5[%c20, %c0_19] : memref<196x384xf32, #tpu.memory_space<vmem>>, vector<4x384xf32>
    tpu.vector_store %arg5[%c20, %c0_19], %16 {strides = array<i32>} : memref<196x384xf32, #tpu.memory_space<vmem>>, vector<4x384xf32>,
    %c0_20 = arith.constant 0 : index
    %c0_21 = arith.constant 0 : index
    %c6 = arith.constant 6 : index
    %18 = vector.load %arg1[%c0_20, %c0_21, %c6] : memref<1x4x522xf32, #tpu.memory_space<vmem>>, vector<1x4x384xf32>
    %19 = vector.shape_cast %18 : vector<1x4x384xf32> to vector<4x384xf32>
    %c24 = arith.constant 24 : index
    %c0_22 = arith.constant 0 : index
    %20 = vector.load %arg5[%c24, %c0_22] : memref<196x384xf32, #tpu.memory_space<vmem>>, vector<4x384xf32>
    tpu.vector_store %arg5[%c24, %c0_22], %19 {strides = array<i32>} : memref<196x384xf32, #tpu.memory_space<vmem>>, vector<4x384xf32>,
    %c0_23 = arith.constant 0 : index
    %c0_24 = arith.constant 0 : index
    %c22 = arith.constant 22 : index
    %21 = vector.load %arg1[%c0_23, %c0_24, %c22] : memref<1x4x522xf32, #tpu.memory_space<vmem>>, vector<1x4x384xf32>
    %22 = vector.shape_cast %21 : vector<1x4x384xf32> to vector<4x384xf32>
    %c28 = arith.constant 28 : index
    %c0_25 = arith.constant 0 : index
    %23 = vector.load %arg5[%c28, %c0_25] : memref<196x384xf32, #tpu.memory_space<vmem>>, vector<4x384xf32>
    tpu.vector_store %arg5[%c28, %c0_25], %22 {strides = array<i32>} : memref<196x384xf32, #tpu.memory_space<vmem>>, vector<4x384xf32>,
    %c0_26 = arith.constant 0 : index
    %c0_27 = arith.constant 0 : index
    %c23 = arith.constant 23 : index
    %24 = vector.load %arg1[%c0_26, %c0_27, %c23] : memref<1x4x522xf32, #tpu.memory_space<vmem>>, vector<1x4x384xf32>
    %25 = vector.shape_cast %24 : vector<1x4x384xf32> to vector<4x384xf32>
    %c32 = arith.constant 32 : index
    %c0_28 = arith.constant 0 : index
    %26 = vector.load %arg5[%c32, %c0_28] : memref<196x384xf32, #tpu.memory_space<vmem>>, vector<4x384xf32>
    tpu.vector_store %arg5[%c32, %c0_28], %25 {strides = array<i32>} : memref<196x384xf32, #tpu.memory_space<vmem>>, vector<4x384xf32>,
    %c0_29 = arith.constant 0 : index
    %c0_30 = arith.constant 0 : index
    %c24_31 = arith.constant 24 : index
    %27 = vector.load %arg1[%c0_29, %c0_30, %c24_31] : memref<1x4x522xf32, #tpu.memory_space<vmem>>, vector<1x4x384xf32>
    %28 = vector.shape_cast %27 : vector<1x4x384xf32> to vector<4x384xf32>
    %c36 = arith.constant 36 : index
    %c0_32 = arith.constant 0 : index
    %29 = vector.load %arg5[%c36, %c0_32] : memref<196x384xf32, #tpu.memory_space<vmem>>, vector<4x384xf32>
    tpu.vector_store %arg5[%c36, %c0_32], %28 {strides = array<i32>} : memref<196x384xf32, #tpu.memory_space<vmem>>, vector<4x384xf32>,
    %c0_33 = arith.constant 0 : index
    %c0_34 = arith.constant 0 : index
    %c25 = arith.constant 25 : index
    %30 = vector.load %arg1[%c0_33, %c0_34, %c25] : memref<1x4x522xf32, #tpu.memory_space<vmem>>, vector<1x4x384xf32>
    %31 = vector.shape_cast %30 : vector<1x4x384xf32> to vector<4x384xf32>
    %c40 = arith.constant 40 : index
    %c0_35 = arith.constant 0 : index
    %32 = vector.load %arg5[%c40, %c0_35] : memref<196x384xf32, #tpu.memory_space<vmem>>, vector<4x384xf32>
    tpu.vector_store %arg5[%c40, %c0_35], %31 {strides = array<i32>} : memref<196x384xf32, #tpu.memory_space<vmem>>, vector<4x384xf32>,
    %c0_36 = arith.constant 0 : index
    %c0_37 = arith.constant 0 : index
    %c26 = arith.constant 26 : index
    %33 = vector.load %arg1[%c0_36, %c0_37, %c26] : memref<1x4x522xf32, #tpu.memory_space<vmem>>, vector<1x4x384xf32>
    %34 = vector.shape_cast %33 : vector<1x4x384xf32> to vector<4x384xf32>
    %c44 = arith.constant 44 : index
    %c0_38 = arith.constant 0 : index
    %35 = vector.load %arg5[%c44, %c0_38] : memref<196x384xf32, #tpu.memory_space<vmem>>, vector<4x384xf32>
    tpu.vector_store %arg5[%c44, %c0_38], %34 {strides = array<i32>} : memref<196x384xf32, #tpu.memory_space<vmem>>, vector<4x384xf32>,
    %c0_39 = arith.constant 0 : index
    %c0_40 = arith.constant 0 : index
    %c27 = arith.constant 27 : index
    %36 = vector.load %arg1[%c0_39, %c0_40, %c27] : memref<1x4x522xf32, #tpu.memory_space<vmem>>, vector<1x4x384xf32>
    %37 = vector.shape_cast %36 : vector<1x4x384xf32> to vector<4x384xf32>
    %c48 = arith.constant 48 : index
    %c0_41 = arith.constant 0 : index
    %38 = vector.load %arg5[%c48, %c0_41] : memref<196x384xf32, #tpu.memory_space<vmem>>, vector<4x384xf32>
    tpu.vector_store %arg5[%c48, %c0_41], %37 {strides = array<i32>} : memref<196x384xf32, #tpu.memory_space<vmem>>, vector<4x384xf32>,
    %c0_42 = arith.constant 0 : index
    %c0_43 = arith.constant 0 : index
    %c28_44 = arith.constant 28 : index
    %39 = vector.load %arg1[%c0_42, %c0_43, %c28_44] : memref<1x4x522xf32, #tpu.memory_space<vmem>>, vector<1x4x384xf32>
    %40 = vector.shape_cast %39 : vector<1x4x384xf32> to vector<4x384xf32>
    %c52 = arith.constant 52 : index
    %c0_45 = arith.constant 0 : index
    %41 = vector.load %arg5[%c52, %c0_45] : memref<196x384xf32, #tpu.memory_space<vmem>>, vector<4x384xf32>
    tpu.vector_store %arg5[%c52, %c0_45], %40 {strides = array<i32>} : memref<196x384xf32, #tpu.memory_space<vmem>>, vector<4x384xf32>,
    %c0_46 = arith.constant 0 : index
    %c0_47 = arith.constant 0 : index
    %c44_48 = arith.constant 44 : index
    %42 = vector.load %arg1[%c0_46, %c0_47, %c44_48] : memref<1x4x522xf32, #tpu.memory_space<vmem>>, vector<1x4x384xf32>
    %43 = vector.shape_cast %42 : vector<1x4x384xf32> to vector<4x384xf32>
    %c56 = arith.constant 56 : index
    %c0_49 = arith.constant 0 : index
    %44 = vector.load %arg5[%c56, %c0_49] : memref<196x384xf32, #tpu.memory_space<vmem>>, vector<4x384xf32>
    tpu.vector_store %arg5[%c56, %c0_49], %43 {strides = array<i32>} : memref<196x384xf32, #tpu.memory_space<vmem>>, vector<4x384xf32>,
    %c0_50 = arith.constant 0 : index
    %c0_51 = arith.constant 0 : index
    %c45 = arith.constant 45 : index
    %45 = vector.load %arg1[%c0_50, %c0_51, %c45] : memref<1x4x522xf32, #tpu.memory_space<vmem>>, vector<1x4x384xf32>
    %46 = vector.shape_cast %45 : vector<1x4x384xf32> to vector<4x384xf32>
    %c60 = arith.constant 60 : index
    %c0_52 = arith.constant 0 : index
    %47 = vector.load %arg5[%c60, %c0_52] : memref<196x384xf32, #tpu.memory_space<vmem>>, vector<4x384xf32>
    tpu.vector_store %arg5[%c60, %c0_52], %46 {strides = array<i32>} : memref<196x384xf32, #tpu.memory_space<vmem>>, vector<4x384xf32>,
    %c0_53 = arith.constant 0 : index
    %c0_54 = arith.constant 0 : index
    %c46 = arith.constant 46 : index
    %48 = vector.load %arg1[%c0_53, %c0_54, %c46] : memref<1x4x522xf32, #tpu.memory_space<vmem>>, vector<1x4x384xf32>
    %49 = vector.shape_cast %48 : vector<1x4x384xf32> to vector<4x384xf32>
    %c64 = arith.constant 64 : index
    %c0_55 = arith.constant 0 : index
    %50 = vector.load %arg5[%c64, %c0_55] : memref<196x384xf32, #tpu.memory_space<vmem>>, vector<4x384xf32>
    tpu.vector_store %arg5[%c64, %c0_55], %49 {strides = array<i32>} : memref<196x384xf32, #tpu.memory_space<vmem>>, vector<4x384xf32>,
    %c0_56 = arith.constant 0 : index
    %c0_57 = arith.constant 0 : index
    %c47 = arith.constant 47 : index
    %51 = vector.load %arg1[%c0_56, %c0_57, %c47] : memref<1x4x522xf32, #tpu.memory_space<vmem>>, vector<1x4x384xf32>
    %52 = vector.shape_cast %51 : vector<1x4x384xf32> to vector<4x384xf32>
    %c68 = arith.constant 68 : index
    %c0_58 = arith.constant 0 : index
    %53 = vector.load %arg5[%c68, %c0_58] : memref<196x384xf32, #tpu.memory_space<vmem>>, vector<4x384xf32>
    tpu.vector_store %arg5[%c68, %c0_58], %52 {strides = array<i32>} : memref<196x384xf32, #tpu.memory_space<vmem>>, vector<4x384xf32>,
    %c0_59 = arith.constant 0 : index
    %c0_60 = arith.constant 0 : index
    %c48_61 = arith.constant 48 : index
    %54 = vector.load %arg1[%c0_59, %c0_60, %c48_61] : memref<1x4x522xf32, #tpu.memory_space<vmem>>, vector<1x4x384xf32>
    %55 = vector.shape_cast %54 : vector<1x4x384xf32> to vector<4x384xf32>
    %c72 = arith.constant 72 : index
    %c0_62 = arith.constant 0 : index
    %56 = vector.load %arg5[%c72, %c0_62] : memref<196x384xf32, #tpu.memory_space<vmem>>, vector<4x384xf32>
    tpu.vector_store %arg5[%c72, %c0_62], %55 {strides = array<i32>} : memref<196x384xf32, #tpu.memory_space<vmem>>, vector<4x384xf32>,
    %c0_63 = arith.constant 0 : index
    %c0_64 = arith.constant 0 : index
    %c49 = arith.constant 49 : index
    %57 = vector.load %arg1[%c0_63, %c0_64, %c49] : memref<1x4x522xf32, #tpu.memory_space<vmem>>, vector<1x4x384xf32>
    %58 = vector.shape_cast %57 : vector<1x4x384xf32> to vector<4x384xf32>
    %c76 = arith.constant 76 : index
    %c0_65 = arith.constant 0 : index
    %59 = vector.load %arg5[%c76, %c0_65] : memref<196x384xf32, #tpu.memory_space<vmem>>, vector<4x384xf32>
    tpu.vector_store %arg5[%c76, %c0_65], %58 {strides = array<i32>} : memref<196x384xf32, #tpu.memory_space<vmem>>, vector<4x384xf32>,
    %c0_66 = arith.constant 0 : index
    %c0_67 = arith.constant 0 : index
    %c50 = arith.constant 50 : index
    %60 = vector.load %arg1[%c0_66, %c0_67, %c50] : memref<1x4x522xf32, #tpu.memory_space<vmem>>, vector<1x4x384xf32>
    %61 = vector.shape_cast %60 : vector<1x4x384xf32> to vector<4x384xf32>
    %c80 = arith.constant 80 : index
    %c0_68 = arith.constant 0 : index
    %62 = vector.load %arg5[%c80, %c0_68] : memref<196x384xf32, #tpu.memory_space<vmem>>, vector<4x384xf32>
    tpu.vector_store %arg5[%c80, %c0_68], %61 {strides = array<i32>} : memref<196x384xf32, #tpu.memory_space<vmem>>, vector<4x384xf32>,
    %c0_69 = arith.constant 0 : index
    %c0_70 = arith.constant 0 : index
    %c66 = arith.constant 66 : index
    %63 = vector.load %arg1[%c0_69, %c0_70, %c66] : memref<1x4x522xf32, #tpu.memory_space<vmem>>, vector<1x4x384xf32>
    %64 = vector.shape_cast %63 : vector<1x4x384xf32> to vector<4x384xf32>
    %c84 = arith.constant 84 : index
    %c0_71 = arith.constant 0 : index
    %65 = vector.load %arg5[%c84, %c0_71] : memref<196x384xf32, #tpu.memory_space<vmem>>, vector<4x384xf32>
    tpu.vector_store %arg5[%c84, %c0_71], %64 {strides = array<i32>} : memref<196x384xf32, #tpu.memory_space<vmem>>, vector<4x384xf32>,
    %c0_72 = arith.constant 0 : index
    %c0_73 = arith.constant 0 : index
    %c67 = arith.constant 67 : index
    %66 = vector.load %arg1[%c0_72, %c0_73, %c67] : memref<1x4x522xf32, #tpu.memory_space<vmem>>, vector<1x4x384xf32>
    %67 = vector.shape_cast %66 : vector<1x4x384xf32> to vector<4x384xf32>
    %c88 = arith.constant 88 : index
    %c0_74 = arith.constant 0 : index
    %68 = vector.load %arg5[%c88, %c0_74] : memref<196x384xf32, #tpu.memory_space<vmem>>, vector<4x384xf32>
    tpu.vector_store %arg5[%c88, %c0_74], %67 {strides = array<i32>} : memref<196x384xf32, #tpu.memory_space<vmem>>, vector<4x384xf32>,
    %c0_75 = arith.constant 0 : index
    %c0_76 = arith.constant 0 : index
    %c68_77 = arith.constant 68 : index
    %69 = vector.load %arg1[%c0_75, %c0_76, %c68_77] : memref<1x4x522xf32, #tpu.memory_space<vmem>>, vector<1x4x384xf32>
    %70 = vector.shape_cast %69 : vector<1x4x384xf32> to vector<4x384xf32>
    %c92 = arith.constant 92 : index
    %c0_78 = arith.constant 0 : index
    %71 = vector.load %arg5[%c92, %c0_78] : memref<196x384xf32, #tpu.memory_space<vmem>>, vector<4x384xf32>
    tpu.vector_store %arg5[%c92, %c0_78], %70 {strides = array<i32>} : memref<196x384xf32, #tpu.memory_space<vmem>>, vector<4x384xf32>,
    %c0_79 = arith.constant 0 : index
    %c0_80 = arith.constant 0 : index
    %c69 = arith.constant 69 : index
    %72 = vector.load %arg1[%c0_79, %c0_80, %c69] : memref<1x4x522xf32, #tpu.memory_space<vmem>>, vector<1x4x384xf32>
    %73 = vector.shape_cast %72 : vector<1x4x384xf32> to vector<4x384xf32>
    %c96 = arith.constant 96 : index
    %c0_81 = arith.constant 0 : index
    %74 = vector.load %arg5[%c96, %c0_81] : memref<196x384xf32, #tpu.memory_space<vmem>>, vector<4x384xf32>
    tpu.vector_store %arg5[%c96, %c0_81], %73 {strides = array<i32>} : memref<196x384xf32, #tpu.memory_space<vmem>>, vector<4x384xf32>,
    %c0_82 = arith.constant 0 : index
    %c0_83 = arith.constant 0 : index
    %c70 = arith.constant 70 : index
    %75 = vector.load %arg1[%c0_82, %c0_83, %c70] : memref<1x4x522xf32, #tpu.memory_space<vmem>>, vector<1x4x384xf32>
    %76 = vector.shape_cast %75 : vector<1x4x384xf32> to vector<4x384xf32>
    %c100 = arith.constant 100 : index
    %c0_84 = arith.constant 0 : index
    %77 = vector.load %arg5[%c100, %c0_84] : memref<196x384xf32, #tpu.memory_space<vmem>>, vector<4x384xf32>
    tpu.vector_store %arg5[%c100, %c0_84], %76 {strides = array<i32>} : memref<196x384xf32, #tpu.memory_space<vmem>>, vector<4x384xf32>,
    %c0_85 = arith.constant 0 : index
    %c0_86 = arith.constant 0 : index
    %c71 = arith.constant 71 : index
    %78 = vector.load %arg1[%c0_85, %c0_86, %c71] : memref<1x4x522xf32, #tpu.memory_space<vmem>>, vector<1x4x384xf32>
    %79 = vector.shape_cast %78 : vector<1x4x384xf32> to vector<4x384xf32>
    %c104 = arith.constant 104 : index
    %c0_87 = arith.constant 0 : index
    %80 = vector.load %arg5[%c104, %c0_87] : memref<196x384xf32, #tpu.memory_space<vmem>>, vector<4x384xf32>
    tpu.vector_store %arg5[%c104, %c0_87], %79 {strides = array<i32>} : memref<196x384xf32, #tpu.memory_space<vmem>>, vector<4x384xf32>,
    %c0_88 = arith.constant 0 : index
    %c0_89 = arith.constant 0 : index
    %c72_90 = arith.constant 72 : index
    %81 = vector.load %arg1[%c0_88, %c0_89, %c72_90] : memref<1x4x522xf32, #tpu.memory_space<vmem>>, vector<1x4x384xf32>
    %82 = vector.shape_cast %81 : vector<1x4x384xf32> to vector<4x384xf32>
    %c108 = arith.constant 108 : index
    %c0_91 = arith.constant 0 : index
    %83 = vector.load %arg5[%c108, %c0_91] : memref<196x384xf32, #tpu.memory_space<vmem>>, vector<4x384xf32>
    tpu.vector_store %arg5[%c108, %c0_91], %82 {strides = array<i32>} : memref<196x384xf32, #tpu.memory_space<vmem>>, vector<4x384xf32>,
    %c0_92 = arith.constant 0 : index
    %c0_93 = arith.constant 0 : index
    %c88_94 = arith.constant 88 : index
    %84 = vector.load %arg1[%c0_92, %c0_93, %c88_94] : memref<1x4x522xf32, #tpu.memory_space<vmem>>, vector<1x4x384xf32>
    %85 = vector.shape_cast %84 : vector<1x4x384xf32> to vector<4x384xf32>
    %c112 = arith.constant 112 : index
    %c0_95 = arith.constant 0 : index
    %86 = vector.load %arg5[%c112, %c0_95] : memref<196x384xf32, #tpu.memory_space<vmem>>, vector<4x384xf32>
    tpu.vector_store %arg5[%c112, %c0_95], %85 {strides = array<i32>} : memref<196x384xf32, #tpu.memory_space<vmem>>, vector<4x384xf32>,
    %c0_96 = arith.constant 0 : index
    %c0_97 = arith.constant 0 : index
    %c89 = arith.constant 89 : index
    %87 = vector.load %arg1[%c0_96, %c0_97, %c89] : memref<1x4x522xf32, #tpu.memory_space<vmem>>, vector<1x4x384xf32>
    %88 = vector.shape_cast %87 : vector<1x4x384xf32> to vector<4x384xf32>
    %c116 = arith.constant 116 : index
    %c0_98 = arith.constant 0 : index
    %89 = vector.load %arg5[%c116, %c0_98] : memref<196x384xf32, #tpu.memory_space<vmem>>, vector<4x384xf32>
    tpu.vector_store %arg5[%c116, %c0_98], %88 {strides = array<i32>} : memref<196x384xf32, #tpu.memory_space<vmem>>, vector<4x384xf32>,
    %c0_99 = arith.constant 0 : index
    %c0_100 = arith.constant 0 : index
    %c90 = arith.constant 90 : index
    %90 = vector.load %arg1[%c0_99, %c0_100, %c90] : memref<1x4x522xf32, #tpu.memory_space<vmem>>, vector<1x4x384xf32>
    %91 = vector.shape_cast %90 : vector<1x4x384xf32> to vector<4x384xf32>
    %c120 = arith.constant 120 : index
    %c0_101 = arith.constant 0 : index
    %92 = vector.load %arg5[%c120, %c0_101] : memref<196x384xf32, #tpu.memory_space<vmem>>, vector<4x384xf32>
    tpu.vector_store %arg5[%c120, %c0_101], %91 {strides = array<i32>} : memref<196x384xf32, #tpu.memory_space<vmem>>, vector<4x384xf32>,
    %c0_102 = arith.constant 0 : index
    %c0_103 = arith.constant 0 : index
    %c91 = arith.constant 91 : index
    %93 = vector.load %arg1[%c0_102, %c0_103, %c91] : memref<1x4x522xf32, #tpu.memory_space<vmem>>, vector<1x4x384xf32>
    %94 = vector.shape_cast %93 : vector<1x4x384xf32> to vector<4x384xf32>
    %c124 = arith.constant 124 : index
    %c0_104 = arith.constant 0 : index
    %95 = vector.load %arg5[%c124, %c0_104] : memref<196x384xf32, #tpu.memory_space<vmem>>, vector<4x384xf32>
    tpu.vector_store %arg5[%c124, %c0_104], %94 {strides = array<i32>} : memref<196x384xf32, #tpu.memory_space<vmem>>, vector<4x384xf32>,
    %c0_105 = arith.constant 0 : index
    %c0_106 = arith.constant 0 : index
    %c92_107 = arith.constant 92 : index
    %96 = vector.load %arg1[%c0_105, %c0_106, %c92_107] : memref<1x4x522xf32, #tpu.memory_space<vmem>>, vector<1x4x384xf32>
    %97 = vector.shape_cast %96 : vector<1x4x384xf32> to vector<4x384xf32>
    %c128 = arith.constant 128 : index
    %c0_108 = arith.constant 0 : index
    %98 = vector.load %arg5[%c128, %c0_108] : memref<196x384xf32, #tpu.memory_space<vmem>>, vector<4x384xf32>
    tpu.vector_store %arg5[%c128, %c0_108], %97 {strides = array<i32>} : memref<196x384xf32, #tpu.memory_space<vmem>>, vector<4x384xf32>,
    %c0_109 = arith.constant 0 : index
    %c0_110 = arith.constant 0 : index
    %c93 = arith.constant 93 : index
    %99 = vector.load %arg1[%c0_109, %c0_110, %c93] : memref<1x4x522xf32, #tpu.memory_space<vmem>>, vector<1x4x384xf32>
    %100 = vector.shape_cast %99 : vector<1x4x384xf32> to vector<4x384xf32>
    %c132 = arith.constant 132 : index
    %c0_111 = arith.constant 0 : index
    %101 = vector.load %arg5[%c132, %c0_111] : memref<196x384xf32, #tpu.memory_space<vmem>>, vector<4x384xf32>
    tpu.vector_store %arg5[%c132, %c0_111], %100 {strides = array<i32>} : memref<196x384xf32, #tpu.memory_space<vmem>>, vector<4x384xf32>,
    %c0_112 = arith.constant 0 : index
    %c0_113 = arith.constant 0 : index
    %c94 = arith.constant 94 : index
    %102 = vector.load %arg1[%c0_112, %c0_113, %c94] : memref<1x4x522xf32, #tpu.memory_space<vmem>>, vector<1x4x384xf32>
    %103 = vector.shape_cast %102 : vector<1x4x384xf32> to vector<4x384xf32>
    %c136 = arith.constant 136 : index
    %c0_114 = arith.constant 0 : index
    %104 = vector.load %arg5[%c136, %c0_114] : memref<196x384xf32, #tpu.memory_space<vmem>>, vector<4x384xf32>
    tpu.vector_store %arg5[%c136, %c0_114], %103 {strides = array<i32>} : memref<196x384xf32, #tpu.memory_space<vmem>>, vector<4x384xf32>,
    %c0_115 = arith.constant 0 : index
    %c0_116 = arith.constant 0 : index
    %c110 = arith.constant 110 : index
    %105 = vector.load %arg1[%c0_115, %c0_116, %c110] : memref<1x4x522xf32, #tpu.memory_space<vmem>>, vector<1x4x384xf32>
    %106 = vector.shape_cast %105 : vector<1x4x384xf32> to vector<4x384xf32>
    %c140 = arith.constant 140 : index
    %c0_117 = arith.constant 0 : index
    %107 = vector.load %arg5[%c140, %c0_117] : memref<196x384xf32, #tpu.memory_space<vmem>>, vector<4x384xf32>
    tpu.vector_store %arg5[%c140, %c0_117], %106 {strides = array<i32>} : memref<196x384xf32, #tpu.memory_space<vmem>>, vector<4x384xf32>,
    %c0_118 = arith.constant 0 : index
    %c0_119 = arith.constant 0 : index
    %c111 = arith.constant 111 : index
    %108 = vector.load %arg1[%c0_118, %c0_119, %c111] : memref<1x4x522xf32, #tpu.memory_space<vmem>>, vector<1x4x384xf32>
    %109 = vector.shape_cast %108 : vector<1x4x384xf32> to vector<4x384xf32>
    %c144 = arith.constant 144 : index
    %c0_120 = arith.constant 0 : index
    %110 = vector.load %arg5[%c144, %c0_120] : memref<196x384xf32, #tpu.memory_space<vmem>>, vector<4x384xf32>
    tpu.vector_store %arg5[%c144, %c0_120], %109 {strides = array<i32>} : memref<196x384xf32, #tpu.memory_space<vmem>>, vector<4x384xf32>,
    %c0_121 = arith.constant 0 : index
    %c0_122 = arith.constant 0 : index
    %c112_123 = arith.constant 112 : index
    %111 = vector.load %arg1[%c0_121, %c0_122, %c112_123] : memref<1x4x522xf32, #tpu.memory_space<vmem>>, vector<1x4x384xf32>
    %112 = vector.shape_cast %111 : vector<1x4x384xf32> to vector<4x384xf32>
    %c148 = arith.constant 148 : index
    %c0_124 = arith.constant 0 : index
    %113 = vector.load %arg5[%c148, %c0_124] : memref<196x384xf32, #tpu.memory_space<vmem>>, vector<4x384xf32>
    tpu.vector_store %arg5[%c148, %c0_124], %112 {strides = array<i32>} : memref<196x384xf32, #tpu.memory_space<vmem>>, vector<4x384xf32>,
    %c0_125 = arith.constant 0 : index
    %c0_126 = arith.constant 0 : index
    %c113 = arith.constant 113 : index
    %114 = vector.load %arg1[%c0_125, %c0_126, %c113] : memref<1x4x522xf32, #tpu.memory_space<vmem>>, vector<1x4x384xf32>
    %115 = vector.shape_cast %114 : vector<1x4x384xf32> to vector<4x384xf32>
    %c152 = arith.constant 152 : index
    %c0_127 = arith.constant 0 : index
    %116 = vector.load %arg5[%c152, %c0_127] : memref<196x384xf32, #tpu.memory_space<vmem>>, vector<4x384xf32>
    tpu.vector_store %arg5[%c152, %c0_127], %115 {strides = array<i32>} : memref<196x384xf32, #tpu.memory_space<vmem>>, vector<4x384xf32>,
    %c0_128 = arith.constant 0 : index
    %c0_129 = arith.constant 0 : index
    %c114 = arith.constant 114 : index
    %117 = vector.load %arg1[%c0_128, %c0_129, %c114] : memref<1x4x522xf32, #tpu.memory_space<vmem>>, vector<1x4x384xf32>
    %118 = vector.shape_cast %117 : vector<1x4x384xf32> to vector<4x384xf32>
    %c156 = arith.constant 156 : index
    %c0_130 = arith.constant 0 : index
    %119 = vector.load %arg5[%c156, %c0_130] : memref<196x384xf32, #tpu.memory_space<vmem>>, vector<4x384xf32>
    tpu.vector_store %arg5[%c156, %c0_130], %118 {strides = array<i32>} : memref<196x384xf32, #tpu.memory_space<vmem>>, vector<4x384xf32>,
    %c0_131 = arith.constant 0 : index
    %c0_132 = arith.constant 0 : index
    %c115 = arith.constant 115 : index
    %120 = vector.load %arg1[%c0_131, %c0_132, %c115] : memref<1x4x522xf32, #tpu.memory_space<vmem>>, vector<1x4x384xf32>
    %121 = vector.shape_cast %120 : vector<1x4x384xf32> to vector<4x384xf32>
    %c160 = arith.constant 160 : index
    %c0_133 = arith.constant 0 : index
    %122 = vector.load %arg5[%c160, %c0_133] : memref<196x384xf32, #tpu.memory_space<vmem>>, vector<4x384xf32>
    tpu.vector_store %arg5[%c160, %c0_133], %121 {strides = array<i32>} : memref<196x384xf32, #tpu.memory_space<vmem>>, vector<4x384xf32>,
    %c0_134 = arith.constant 0 : index
    %c0_135 = arith.constant 0 : index
    %c116_136 = arith.constant 116 : index
    %123 = vector.load %arg1[%c0_134, %c0_135, %c116_136] : memref<1x4x522xf32, #tpu.memory_space<vmem>>, vector<1x4x384xf32>
    %124 = vector.shape_cast %123 : vector<1x4x384xf32> to vector<4x384xf32>
    %c164 = arith.constant 164 : index
    %c0_137 = arith.constant 0 : index
    %125 = vector.load %arg5[%c164, %c0_137] : memref<196x384xf32, #tpu.memory_space<vmem>>, vector<4x384xf32>
    tpu.vector_store %arg5[%c164, %c0_137], %124 {strides = array<i32>} : memref<196x384xf32, #tpu.memory_space<vmem>>, vector<4x384xf32>,
    %c0_138 = arith.constant 0 : index
    %c0_139 = arith.constant 0 : index
    %c132_140 = arith.constant 132 : index
    %126 = vector.load %arg1[%c0_138, %c0_139, %c132_140] : memref<1x4x522xf32, #tpu.memory_space<vmem>>, vector<1x4x384xf32>
    %127 = vector.shape_cast %126 : vector<1x4x384xf32> to vector<4x384xf32>
    %c168 = arith.constant 168 : index
    %c0_141 = arith.constant 0 : index
    %128 = vector.load %arg5[%c168, %c0_141] : memref<196x384xf32, #tpu.memory_space<vmem>>, vector<4x384xf32>
    tpu.vector_store %arg5[%c168, %c0_141], %127 {strides = array<i32>} : memref<196x384xf32, #tpu.memory_space<vmem>>, vector<4x384xf32>,
    %c0_142 = arith.constant 0 : index
    %c0_143 = arith.constant 0 : index
    %c133 = arith.constant 133 : index
    %129 = vector.load %arg1[%c0_142, %c0_143, %c133] : memref<1x4x522xf32, #tpu.memory_space<vmem>>, vector<1x4x384xf32>
    %130 = vector.shape_cast %129 : vector<1x4x384xf32> to vector<4x384xf32>
    %c172 = arith.constant 172 : index
    %c0_144 = arith.constant 0 : index
    %131 = vector.load %arg5[%c172, %c0_144] : memref<196x384xf32, #tpu.memory_space<vmem>>, vector<4x384xf32>
    tpu.vector_store %arg5[%c172, %c0_144], %130 {strides = array<i32>} : memref<196x384xf32, #tpu.memory_space<vmem>>, vector<4x384xf32>,
    %c0_145 = arith.constant 0 : index
    %c0_146 = arith.constant 0 : index
    %c134 = arith.constant 134 : index
    %132 = vector.load %arg1[%c0_145, %c0_146, %c134] : memref<1x4x522xf32, #tpu.memory_space<vmem>>, vector<1x4x384xf32>
    %133 = vector.shape_cast %132 : vector<1x4x384xf32> to vector<4x384xf32>
    %c176 = arith.constant 176 : index
    %c0_147 = arith.constant 0 : index
    %134 = vector.load %arg5[%c176, %c0_147] : memref<196x384xf32, #tpu.memory_space<vmem>>, vector<4x384xf32>
    tpu.vector_store %arg5[%c176, %c0_147], %133 {strides = array<i32>} : memref<196x384xf32, #tpu.memory_space<vmem>>, vector<4x384xf32>,
    %c0_148 = arith.constant 0 : index
    %c0_149 = arith.constant 0 : index
    %c135 = arith.constant 135 : index
    %135 = vector.load %arg1[%c0_148, %c0_149, %c135] : memref<1x4x522xf32, #tpu.memory_space<vmem>>, vector<1x4x384xf32>
    %136 = vector.shape_cast %135 : vector<1x4x384xf32> to vector<4x384xf32>
    %c180 = arith.constant 180 : index
    %c0_150 = arith.constant 0 : index
    %137 = vector.load %arg5[%c180, %c0_150] : memref<196x384xf32, #tpu.memory_space<vmem>>, vector<4x384xf32>
    tpu.vector_store %arg5[%c180, %c0_150], %136 {strides = array<i32>} : memref<196x384xf32, #tpu.memory_space<vmem>>, vector<4x384xf32>,
    %c0_151 = arith.constant 0 : index
    %c0_152 = arith.constant 0 : index
    %c136_153 = arith.constant 136 : index
    %138 = vector.load %arg1[%c0_151, %c0_152, %c136_153] : memref<1x4x522xf32, #tpu.memory_space<vmem>>, vector<1x4x384xf32>
    %139 = vector.shape_cast %138 : vector<1x4x384xf32> to vector<4x384xf32>
    %c184 = arith.constant 184 : index
    %c0_154 = arith.constant 0 : index
    %140 = vector.load %arg5[%c184, %c0_154] : memref<196x384xf32, #tpu.memory_space<vmem>>, vector<4x384xf32>
    tpu.vector_store %arg5[%c184, %c0_154], %139 {strides = array<i32>} : memref<196x384xf32, #tpu.memory_space<vmem>>, vector<4x384xf32>,
    %c0_155 = arith.constant 0 : index
    %c0_156 = arith.constant 0 : index
    %c137 = arith.constant 137 : index
    %141 = vector.load %arg1[%c0_155, %c0_156, %c137] : memref<1x4x522xf32, #tpu.memory_space<vmem>>, vector<1x4x384xf32>
    %142 = vector.shape_cast %141 : vector<1x4x384xf32> to vector<4x384xf32>
    %c188 = arith.constant 188 : index
    %c0_157 = arith.constant 0 : index
    %143 = vector.load %arg5[%c188, %c0_157] : memref<196x384xf32, #tpu.memory_space<vmem>>, vector<4x384xf32>
    tpu.vector_store %arg5[%c188, %c0_157], %142 {strides = array<i32>} : memref<196x384xf32, #tpu.memory_space<vmem>>, vector<4x384xf32>,
    %c0_158 = arith.constant 0 : index
    %c0_159 = arith.constant 0 : index
    %c138 = arith.constant 138 : index
    %144 = vector.load %arg1[%c0_158, %c0_159, %c138] : memref<1x4x522xf32, #tpu.memory_space<vmem>>, vector<1x4x384xf32>
    %145 = vector.shape_cast %144 : vector<1x4x384xf32> to vector<4x384xf32>
    %c192 = arith.constant 192 : index
    %c0_160 = arith.constant 0 : index
    %146 = vector.load %arg5[%c192, %c0_160] : memref<196x384xf32, #tpu.memory_space<vmem>>, vector<4x384xf32>
    tpu.vector_store %arg5[%c192, %c0_160], %145 {strides = array<i32>} : memref<196x384xf32, #tpu.memory_space<vmem>>, vector<4x384xf32>,
    %c0_161 = arith.constant 0 : index
    %c0_162 = arith.constant 0 : index
    %147 = vector.load %arg2[%c0_161, %c0_162] : memref<8x196xf32, #tpu.memory_space<vmem>>, vector<8x196xf32>
    %c0_163 = arith.constant 0 : index
    %c0_164 = arith.constant 0 : index
    %148 = vector.load %arg5[%c0_163, %c0_164] : memref<196x384xf32, #tpu.memory_space<vmem>>, vector<196x384xf32>
    %cst = arith.constant dense<0.000000e+00> : vector<8x384xf32>
    %149 = tpu.matmul %147, %148, %cst {dimension_numbers = #tpu.dot_dimension_numbers<[1], [0], [0], [1], [0, 0, 1, 1], [], []>} : vector<8x196xf32>, vector<196x384xf32>, vector<8x384xf32> -> vector<8x384xf32>
    %c0_165 = arith.constant 0 : index
    %c0_166 = arith.constant 0 : index
    %150 = vector.load %arg3[%c0_165, %c0_166] : memref<8x1xf32, #tpu.memory_space<vmem>>, vector<8x1xf32>
    %151 = vector.broadcast %150 : vector<8x1xf32> to vector<8x384xf32>
    %152 = arith.addf %149, %151 : vector<8x384xf32>
    %153 = vector.extract_strided_slice %152 {offsets = [0, 0], sizes = [4, 384], strides = [1, 1]} : vector<8x384xf32> to vector<4x384xf32>
    %154 = vector.extract_strided_slice %152 {offsets = [4, 0], sizes = [4, 384], strides = [1, 1]} : vector<8x384xf32> to vector<4x384xf32>
    %155 = arith.negf %154 : vector<4x384xf32>
    %156 = math.exp %155 : vector<4x384xf32>
    %cst_167 = arith.constant 1.000000e+00 : f32
    %157 = vector.broadcast %cst_167 : f32 to vector<4x384xf32>
    %158 = arith.addf %157, %156 : vector<4x384xf32>
    %159 = arith.divf %157, %158 : vector<4x384xf32>
    %160 = arith.mulf %153, %159 : vector<4x384xf32>
    %c0_168 = arith.constant 0 : index
    %c0_169 = arith.constant 0 : index
    %c0_170 = arith.constant 0 : index
    %161 = vector.load %arg4[%c0_168, %c0_169, %c0_170] : memref<1x4x384xf32, #tpu.memory_space<vmem>>, vector<1x4x384xf32>
    %162 = vector.shape_cast %161 : vector<1x4x384xf32> to vector<4x384xf32>
    %163 = vector.shape_cast %160 : vector<4x384xf32> to vector<1x4x384xf32>
    tpu.vector_store %arg4[%c0_168, %c0_169, %c0_170], %163 {strides = array<i32>} : memref<1x4x384xf32, #tpu.memory_space<vmem>>, vector<1x4x384xf32>,
    return
  }
  func.func @transform_0(%arg0: i32) -> (i32, i32, i32) {
    %c0_i32 = arith.constant 0 : i32
    %c0_i32_0 = arith.constant 0 : i32
    %c0_i32_1 = arith.constant 0 : i32
    return %arg0, %c0_i32, %c0_i32_0 : i32, i32, i32
  }
  func.func @transform_1(%arg0: i32) -> (i32, i32) {
    %c0_i32 = arith.constant 0 : i32
    %c0_i32_0 = arith.constant 0 : i32
    %c0_i32_1 = arith.constant 0 : i32
    return %c0_i32, %c0_i32_0 : i32, i32
  }
  func.func @transform_2(%arg0: i32) -> (i32, i32) {
    %c0_i32 = arith.constant 0 : i32
    %c0_i32_0 = arith.constant 0 : i32
    %c0_i32_1 = arith.constant 0 : i32
    return %c0_i32, %c0_i32_0 : i32, i32
  }
  func.func @transform_3(%arg0: i32) -> (i32, i32, i32) {
    %c0_i32 = arith.constant 0 : i32
    %c0_i32_0 = arith.constant 0 : i32
    %c0_i32_1 = arith.constant 0 : i32
    return %arg0, %c0_i32, %c0_i32_0 : i32, i32, i32
  }
}

</mosaic_0001>

<llo_original>
// kernel: tpu_custom_call.1
$region0: #{tpu_custom_call.1}
  #allocation0 [shape = 'u32[]', space=smem, size = 0x4, offset = 0x4, fixed_abs, tag = 'smem constant byte address 0x4 - core index']
  #allocation1 [shape = 'u32[144,128]{1,0:T(1,128)}', space=vmem, size = 0x12000, scoped, tag = 'internal scratch']
  #allocation2 [shape = 'f32[196,384]{1,0:T(8,128)}', space=vmem, size = 0x4b000, scoped, tag = 'scratch operand']
  %s0 = inlined_call_operand.hbm [shape: f32[2,4,522], index: 0, kind: input, shape index: {}]
  %s1 = inlined_call_operand.hbm [shape: f32[8,196], index: 1, kind: input, shape index: {}]
  %s2 = inlined_call_operand.vmem [shape: f32[8,1], index: 2, kind: input, shape index: {}]
  %s3 = inlined_call_operand.hbm [shape: f32[2,4,384], index: 3, kind: output, shape index: {}]
  %s4 = sld [smem:[#allocation0]]
  $region53: #{tpu_custom_call.1} parent=0
    _
  %s6 = ssub.s32 1, %s4
  %s7 = scalar_select 0, %s6, %s4
  $region1: #{tpu_custom_call.1} parent=0
    #allocation3 [shape = 'u8[20480]{0}', space=vmem, size = 0x5000, scoped, tag = 'input window, operand 0']
    #allocation4 [shape = 's32[2]{0}', space=sflag, size = 0x8, scoped, tag = 'scoped memory for tpu_custom_call.1']
    #allocation5 [shape = 's32[2]{0}', space=sflag, size = 0x8, scoped, tag = 'scoped memory for tpu_custom_call.1']
    #allocation6 [shape = 'u8[8192]{0}', space=vmem, size = 0x2000, scoped, tag = 'input window, operand 1, single buffered']
    #allocation7 [shape = 's32[1]{0}', space=sflag, size = 0x4, scoped, tag = 'scoped memory for tpu_custom_call.1']
    #allocation8 [shape = 'u8[12288]{0}', space=vmem, size = 0x3000, scoped, tag = 'output window, operand 0']
    %8 = vsyncpa [#allocation4], 0
    %s9 = scalar_lea.sflag [#allocation4], 1
    %10 = vsyncpa %s9, 0
    %11 = vsyncpa [#allocation7], 0
    %12 = vsyncpa [#allocation5], 0
    %s13 = scalar_lea.sflag [#allocation5], 1
    %14 = vsyncpa %s13, 0
    loop: start=0, step=1, limit=4
    $region2: #{tpu_custom_call.1} parent=1 // loop_pre_header
      _
    $region3: #{tpu_custom_call.1} parent=1 // loop_header
      %s16 = sphi 0, %s20
      %p17 = scmp.ge.s32.totalorder %s16, 4
      %s26 = sphi 0, %s28
      %s29 = sphi 0, %s26
      %s30 = sphi 0, %s29
      %s46 = sphi 0, %s30
      %s50 = sphi 0, %s50
      %s52 = sphi 0, %s50
      %s53 = sphi 0, %s52
      %s67 = sphi 0, %s53
      %s71 = sphi 0, %s71
      %s73 = sphi 0, %s71
      %s74 = sphi 0, %s73
      %s88 = sphi 0, %s74
      %s94 = sphi 0, %s96
      %s97 = sphi 0, %s94
      %s98 = sphi 0, %s97
      %s114 = sphi 0, %s98
    $region4: #{tpu_custom_call.1} parent=1 // loop_header_branch
      %19 = sbr.rel (%p17) target = $region8
    $region5: #{tpu_custom_call.1} parent=1 // loop_body
      %s21 = ssub.s32 %s16, 1
      %s22 = ssub.s32 %s16, 2
      %s23 = sadd.s32 %s16, 1
      %s24 = ssub.s32 %s16, %s23
      %p25 = scmp.eq.s32.totalorder %s24, 0
      %s27 = sadd.s32 %s26, 1
      %s28 = scalar_select %p25, %s26, %s27
      %p31 = pneg %p25
      %p32 = scmp.eq.s32.totalorder %s16, 1
      %p33 = por %p31, %p32
      %p34 = scmp.ne.s32.totalorder %s26, %s29
      %p35 = scmp.eq.s32.totalorder %s16, 0
      %p36 = por %p34, %p35
      %p37 = scmp.ne.s32.totalorder %s26, %s29
      %p38 = scmp.eq.s32.totalorder %s21, 1
      %p39 = por %p37, %p38
      %p40 = scmp.ne.s32.totalorder %s29, %s30
      %p41 = scmp.eq.s32.totalorder %s21, 0
      %p42 = por %p40, %p41
      %p43 = scmp.ne.s32.totalorder %s29, %s30
      %p44 = scmp.eq.s32.totalorder %s22, 1
      %p45 = por %p43, %p44
      %p47 = scmp.ne.s32.totalorder %s30, %s46
      %p48 = scmp.eq.s32.totalorder %s22, 0
      %p49 = por %p47, %p48
      %s51 = sadd.s32 %s50, 1
      %p54 = scmp.eq.s32.totalorder %s16, 1
      %p55 = scmp.ne.s32.totalorder %s50, %s52
      %p56 = scmp.eq.s32.totalorder %s16, 0
      %p57 = por %p55, %p56
      %p58 = scmp.ne.s32.totalorder %s50, %s52
      %p59 = scmp.eq.s32.totalorder %s21, 1
      %p60 = por %p58, %p59
      %p61 = scmp.ne.s32.totalorder %s52, %s53
      %p62 = scmp.eq.s32.totalorder %s21, 0
      %p63 = por %p61, %p62
      %p64 = scmp.ne.s32.totalorder %s52, %s53
      %p65 = scmp.eq.s32.totalorder %s22, 1
      %p66 = por %p64, %p65
      %p68 = scmp.ne.s32.totalorder %s53, %s67
      %p69 = scmp.eq.s32.totalorder %s22, 0
      %p70 = por %p68, %p69
      %s72 = sadd.s32 %s71, 1
      %p75 = scmp.eq.s32.totalorder %s16, 1
      %p76 = scmp.ne.s32.totalorder %s71, %s73
      %p77 = scmp.eq.s32.totalorder %s16, 0
      %p78 = por %p76, %p77
      %p79 = scmp.ne.s32.totalorder %s71, %s73
      %p80 = scmp.eq.s32.totalorder %s21, 1
      %p81 = por %p79, %p80
      %p82 = scmp.ne.s32.totalorder %s73, %s74
      %p83 = scmp.eq.s32.totalorder %s21, 0
      %p84 = por %p82, %p83
      %p85 = scmp.ne.s32.totalorder %s73, %s74
      %p86 = scmp.eq.s32.totalorder %s22, 1
      %p87 = por %p85, %p86
      %p89 = scmp.ne.s32.totalorder %s74, %s88
      %p90 = scmp.eq.s32.totalorder %s22, 0
      %p91 = por %p89, %p90
      %s92 = ssub.s32 %s16, %s23
      %p93 = scmp.eq.s32.totalorder %s92, 0
      %s95 = sadd.s32 %s94, 1
      %s96 = scalar_select %p93, %s94, %s95
      %p99 = pneg %p93
      %p100 = scmp.eq.s32.totalorder %s16, 1
      %p101 = por %p99, %p100
      %p102 = scmp.ne.s32.totalorder %s94, %s97
      %p103 = scmp.eq.s32.totalorder %s16, 0
      %p104 = por %p102, %p103
      %p105 = scmp.ne.s32.totalorder %s94, %s97
      %p106 = scmp.eq.s32.totalorder %s21, 1
      %p107 = por %p105, %p106
      %p108 = scmp.ne.s32.totalorder %s97, %s98
      %p109 = scmp.eq.s32.totalorder %s21, 0
      %p110 = por %p108, %p109
      %p111 = scmp.ne.s32.totalorder %s97, %s98
      %p112 = scmp.eq.s32.totalorder %s22, 1
      %p113 = por %p111, %p112
      %p115 = scmp.ne.s32.totalorder %s98, %s114
      %p116 = scmp.eq.s32.totalorder %s22, 0
      %p117 = por %p115, %p116
      %p118 = scmp.le.s32.totalorder 1, %s16
      %p119 = scmp.lt.s32.totalorder %s16, 3
      %p120 = pnand %p118, %p119
      %p121 = pneg %p120
      // Predicated region
      $region9: #{tpu_custom_call.1} parent=5 // pred_check
        _
      $region10: #{tpu_custom_call.1} parent=5 // pred_check_branch
        %123 = sbr.rel (%p120) target = $region12
      $region11: #{tpu_custom_call.1} parent=5 // pred_region
        %s124 = ssub.s32 %s16, 1
        // Predicated region
        $region13: #{tpu_custom_call.1} parent=11 // pred_check
          %p125 = pneg %p63
        $region14: #{tpu_custom_call.1} parent=11 // pred_check_branch
          %127 = sbr.rel (%p125) target = $region16
        $region15: #{tpu_custom_call.1} parent=11 // pred_region
          %s129 = ssub.s32 256, 256
          %130 = vsyncadd [#allocation7], %s129
          %s132 = sshll.u32 [#allocation6], 4
          %s133 = int_to_ptr.vmem [resolvable:$true] %s132
          %135 = dma.hbm_to_vmem [thread:$0]  %s1, 256, %s133, [#allocation7]
        $region16: #{tpu_custom_call.1} parent=11 // pred_fallthru
          _
        // Predicated region
        $region17: #{tpu_custom_call.1} parent=11 // pred_check
          %p136 = pneg %p84
        $region18: #{tpu_custom_call.1} parent=11 // pred_check_branch
          %138 = sbr.rel (%p136) target = $region20
        $region19: #{tpu_custom_call.1} parent=11 // pred_region
          _
        $region20: #{tpu_custom_call.1} parent=11 // pred_fallthru
          _
      $region12: #{tpu_custom_call.1} parent=5 // pred_fallthru
        _
      %p139 = scmp.lt.s32.totalorder %s16, 2
      // Predicated region
      $region21: #{tpu_custom_call.1} parent=5 // pred_check
        %p140 = pneg %p139
      $region22: #{tpu_custom_call.1} parent=5 // pred_check_branch
        %142 = sbr.rel (%p140) target = $region24
      $region23: #{tpu_custom_call.1} parent=5 // pred_region
        // Predicated region
        $region25: #{tpu_custom_call.1} parent=23 // pred_check
          %p143 = pneg %p36
        $region26: #{tpu_custom_call.1} parent=23 // pred_check_branch
          %145 = sbr.rel (%p143) target = $region28
        $region27: #{tpu_custom_call.1} parent=23 // pred_region
          %s146 = sand.u32 %s26, 1
          %s147 = scalar_lea.sflag [#allocation4], %s146
          %s148 = sand.u32 %s26, 1
          %s149 = smul.addr %s148, 20
          %s150 = scalar_lea.vmem [#allocation3], %s149
          %s152 = ssub.s32 320, 320
          %153 = vsyncadd %s147, %s152
          %s154 = smul.addr %s16, 5
          %s155 = smul.addr %s154, 64
          %s156 = scalar_lea.hbm %s0, %s155
          %s158 = sshll.u32 %s150, 4
          %s159 = int_to_ptr.vmem [resolvable:$true] %s158
          %161 = dma.hbm_to_vmem [thread:$0]  %s156, 320, %s159, %s147
        $region28: #{tpu_custom_call.1} parent=23 // pred_fallthru
          _
      $region24: #{tpu_custom_call.1} parent=5 // pred_fallthru
        _
      %p162 = scmp.le.s32.totalorder 1, %s16
      %p163 = scmp.lt.s32.totalorder %s16, 3
      %p164 = pnand %p162, %p163
      %p165 = pneg %p164
      // Predicated region
      $region29: #{tpu_custom_call.1} parent=5 // pred_check
        _
      $region30: #{tpu_custom_call.1} parent=5 // pred_check_branch
        %167 = sbr.rel (%p164) target = $region32
      $region31: #{tpu_custom_call.1} parent=5 // pred_region
        %s168 = ssub.s32 %s16, 1
        %s169 = sand.u32 %s29, 1
        %s170 = scalar_lea.sflag [#allocation4], %s169
        %s171 = sand.u32 %s29, 1
        %s172 = smul.addr %s171, 20
        %s173 = scalar_lea.vmem [#allocation3], %s172
        // Predicated region
        $region33: #{tpu_custom_call.1} parent=31 // pred_check
          %p174 = pneg %p42
        $region34: #{tpu_custom_call.1} parent=31 // pred_check_branch
          %176 = sbr.rel (%p174) target = $region36
        $region35: #{tpu_custom_call.1} parent=31 // pred_region
          %177 = dma.done %s170, 320
        $region36: #{tpu_custom_call.1} parent=31 // pred_fallthru
          _
        // Predicated region
        $region37: #{tpu_custom_call.1} parent=31 // pred_check
          %p178 = pneg %p63
        $region38: #{tpu_custom_call.1} parent=31 // pred_check_branch
          %180 = sbr.rel (%p178) target = $region40
        $region39: #{tpu_custom_call.1} parent=31 // pred_region
          %181 = dma.done [#allocation7], 256
        $region40: #{tpu_custom_call.1} parent=31 // pred_fallthru
          _
        %s182 = sand.u32 %s29, 1
        %s183 = scalar_lea.sflag [#allocation4], %s182
        %s184 = sand.u32 %s29, 1
        %s185 = smul.addr %s184, 20
        %s186 = scalar_lea.vmem [#allocation3], %s185
        %p187 = pneg %p42
        %p188 = pneg %p39
        %p189 = pneg %p63
        %p190 = pneg %p60
        %p191 = pneg %p84
        %p192 = pneg %p81
        %p193 = pneg %p110
        %p194 = pneg %p107
        %s195 = sand.u32 %s97, 1
        %s196 = scalar_lea.sflag [#allocation5], %s195
        %s197 = sand.u32 %s97, 1
        %s198 = smul.addr %s197, 12
        %s199 = scalar_lea.vmem [#allocation8], %s198
        %v200 = vld [vmem:[%s173] sm:$0xff]
        %v201 = vld [vmem:[%s173 + $0x8] sm:$0xf]
        %v203 = vcombine.high %v200, %v200
        %205 = vst [vmem:[#allocation2] sm:$0xf] %v200
        %206 = vst [vmem:[#allocation2 + $0x8] sm:$0xf] %v203
        %207 = vst [vmem:[#allocation2 + $0x10] sm:$0xf] %v201
        %v208 = vld [vmem:[%s173] sm:$0xff]
        %v209 = vld [vmem:[%s173 + $0x8] sm:$0xff]
        %v212 = vcombine.low %v208, %v208
        %v213 = vcombine.low %v209, %v209
        %214 = vrot.lane.b32.xlu0 %v212, 127
        %v215 = vpop.permute.xlu0 %214
        %216 = vrot.lane.b32.xlu0 %v208, 127
        %v217 = vpop.permute.xlu0 %216
        %218 = vrot.lane.b32.xlu0 %v213, 127
        %v219 = vpop.permute.xlu0 %218
        %220 = vrot.lane.b32.xlu0 %v209, 127
        %v221 = vpop.permute.xlu0 %220
        %vm222 = vcmask 1039360
        %v223 = vsel %vm222, %v215, %v217
        %v224 = vsel %vm222, %v217, %v219
        %v225 = vsel %vm222, %v219, %v221
        %229 = vst [vmem:[#allocation2] sm:$0xf0] %v223
        %230 = vst [vmem:[#allocation2 + $0x8] sm:$0xf0] %v224
        %231 = vst [vmem:[#allocation2 + $0x10] sm:$0xf0] %v225
        %v232 = vld [vmem:[%s173] sm:$0xff]
        %v233 = vld [vmem:[%s173 + $0x8] sm:$0xff]
        %v236 = vcombine.high %v232, %v232
        %v237 = vcombine.high %v233, %v233
        %238 = vrot.lane.b32.xlu0 %v232, 126
        %v239 = vpop.permute.xlu0 %238
        %240 = vrot.lane.b32.xlu0 %v236, 126
        %v241 = vpop.permute.xlu0 %240
        %242 = vrot.lane.b32.xlu0 %v233, 126
        %v243 = vpop.permute.xlu0 %242
        %244 = vrot.lane.b32.xlu0 %v237, 126
        %v245 = vpop.permute.xlu0 %244
        %vm246 = vcmask 1031168
        %v247 = vsel %vm246, %v239, %v241
        %v248 = vsel %vm246, %v241, %v243
        %v249 = vsel %vm246, %v243, %v245
        %253 = vst [vmem:[#allocation2 + $0x18] sm:$0xf] %v247
        %254 = vst [vmem:[#allocation2 + $0x20] sm:$0xf] %v248
        %255 = vst [vmem:[#allocation2 + $0x28] sm:$0xf] %v249
        %v256 = vld [vmem:[%s173] sm:$0xff]
        %v257 = vld [vmem:[%s173 + $0x8] sm:$0xff]
        %v260 = vcombine.low %v256, %v256
        %v261 = vcombine.low %v257, %v257
        %262 = vrot.lane.b32.xlu0 %v260, 125
        %v263 = vpop.permute.xlu0 %262
        %264 = vrot.lane.b32.xlu0 %v256, 125
        %v265 = vpop.permute.xlu0 %264
        %266 = vrot.lane.b32.xlu0 %v261, 125
        %v267 = vpop.permute.xlu0 %266
        %268 = vrot.lane.b32.xlu0 %v257, 125
        %v269 = vpop.permute.xlu0 %268
        %vm270 = vcmask 1022976
        %v271 = vsel %vm270, %v263, %v265
        %v272 = vsel %vm270, %v265, %v267
        %v273 = vsel %vm270, %v267, %v269
        %277 = vst [vmem:[#allocation2 + $0x18] sm:$0xf0] %v271
        %278 = vst [vmem:[#allocation2 + $0x20] sm:$0xf0] %v272
        %279 = vst [vmem:[#allocation2 + $0x28] sm:$0xf0] %v273
        %v280 = vld [vmem:[%s173] sm:$0xff]
        %v281 = vld [vmem:[%s173 + $0x8] sm:$0xff]
        %v284 = vcombine.high %v280, %v280
        %v285 = vcombine.high %v281, %v281
        %286 = vrot.lane.b32.xlu0 %v280, 124
        %v287 = vpop.permute.xlu0 %286
        %288 = vrot.lane.b32.xlu0 %v284, 124
        %v289 = vpop.permute.xlu0 %288
        %290 = vrot.lane.b32.xlu0 %v281, 124
        %v291 = vpop.permute.xlu0 %290
        %292 = vrot.lane.b32.xlu0 %v285, 124
        %v293 = vpop.permute.xlu0 %292
        %vm294 = vcmask 1014784
        %v295 = vsel %vm294, %v287, %v289
        %v296 = vsel %vm294, %v289, %v291
        %v297 = vsel %vm294, %v291, %v293
        %301 = vst [vmem:[#allocation2 + $0x30] sm:$0xf] %v295
        %302 = vst [vmem:[#allocation2 + $0x38] sm:$0xf] %v296
        %303 = vst [vmem:[#allocation2 + $0x40] sm:$0xf] %v297
        %v304 = vld [vmem:[%s173] sm:$0xff]
        %v305 = vld [vmem:[%s173 + $0x8] sm:$0xff]
        %v308 = vcombine.low %v304, %v304
        %v309 = vcombine.low %v305, %v305
        %310 = vrot.lane.b32.xlu0 %v308, 123
        %v311 = vpop.permute.xlu0 %310
        %312 = vrot.lane.b32.xlu0 %v304, 123
        %v313 = vpop.permute.xlu0 %312
        %314 = vrot.lane.b32.xlu0 %v309, 123
        %v315 = vpop.permute.xlu0 %314
        %316 = vrot.lane.b32.xlu0 %v305, 123
        %v317 = vpop.permute.xlu0 %316
        %vm318 = vcmask 1006592
        %v319 = vsel %vm318, %v311, %v313
        %v320 = vsel %vm318, %v313, %v315
        %v321 = vsel %vm318, %v315, %v317
        %325 = vst [vmem:[#allocation2 + $0x30] sm:$0xf0] %v319
        %326 = vst [vmem:[#allocation2 + $0x38] sm:$0xf0] %v320
        %327 = vst [vmem:[#allocation2 + $0x40] sm:$0xf0] %v321
        %v328 = vld [vmem:[%s173] sm:$0xff]
        %v329 = vld [vmem:[%s173 + $0x8] sm:$0xff]
        %v332 = vcombine.high %v328, %v328
        %v333 = vcombine.high %v329, %v329
        %334 = vrot.lane.b32.xlu0 %v328, 122
        %v335 = vpop.permute.xlu0 %334
        %336 = vrot.lane.b32.xlu0 %v332, 122
        %v337 = vpop.permute.xlu0 %336
        %338 = vrot.lane.b32.xlu0 %v329, 122
        %v339 = vpop.permute.xlu0 %338
        %340 = vrot.lane.b32.xlu0 %v333, 122
        %v341 = vpop.permute.xlu0 %340
        %vm342 = vcmask 998400
        %v343 = vsel %vm342, %v335, %v337
        %v344 = vsel %vm342, %v337, %v339
        %v345 = vsel %vm342, %v339, %v341
        %349 = vst [vmem:[#allocation2 + $0x48] sm:$0xf] %v343
        %350 = vst [vmem:[#allocation2 + $0x50] sm:$0xf] %v344
        %351 = vst [vmem:[#allocation2 + $0x58] sm:$0xf] %v345
        %v352 = vld [vmem:[%s173] sm:$0xff]
        %v353 = vld [vmem:[%s173 + $0x8] sm:$0xff]
        %v356 = vcombine.low %v352, %v352
        %v357 = vcombine.low %v353, %v353
        %358 = vrot.lane.b32.xlu0 %v356, 106
        %v359 = vpop.permute.xlu0 %358
        %360 = vrot.lane.b32.xlu0 %v352, 106
        %v361 = vpop.permute.xlu0 %360
        %362 = vrot.lane.b32.xlu0 %v357, 106
        %v363 = vpop.permute.xlu0 %362
        %364 = vrot.lane.b32.xlu0 %v353, 106
        %v365 = vpop.permute.xlu0 %364
        %vm366 = vcmask 867328
        %v367 = vsel %vm366, %v359, %v361
        %v368 = vsel %vm366, %v361, %v363
        %v369 = vsel %vm366, %v363, %v365
        %373 = vst [vmem:[#allocation2 + $0x48] sm:$0xf0] %v367
        %374 = vst [vmem:[#allocation2 + $0x50] sm:$0xf0] %v368
        %375 = vst [vmem:[#allocation2 + $0x58] sm:$0xf0] %v369
        %v376 = vld [vmem:[%s173] sm:$0xff]
        %v377 = vld [vmem:[%s173 + $0x8] sm:$0xff]
        %v380 = vcombine.high %v376, %v376
        %v381 = vcombine.high %v377, %v377
        %382 = vrot.lane.b32.xlu0 %v376, 105
        %v383 = vpop.permute.xlu0 %382
        %384 = vrot.lane.b32.xlu0 %v380, 105
        %v385 = vpop.permute.xlu0 %384
        %386 = vrot.lane.b32.xlu0 %v377, 105
        %v387 = vpop.permute.xlu0 %386
        %388 = vrot.lane.b32.xlu0 %v381, 105
        %v389 = vpop.permute.xlu0 %388
        %vm390 = vcmask 859136
        %v391 = vsel %vm390, %v383, %v385
        %v392 = vsel %vm390, %v385, %v387
        %v393 = vsel %vm390, %v387, %v389
        %397 = vst [vmem:[#allocation2 + $0x60] sm:$0xf] %v391
        %398 = vst [vmem:[#allocation2 + $0x68] sm:$0xf] %v392
        %399 = vst [vmem:[#allocation2 + $0x70] sm:$0xf] %v393
        %v400 = vld [vmem:[%s173] sm:$0xff]
        %v401 = vld [vmem:[%s173 + $0x8] sm:$0xff]
        %v404 = vcombine.low %v400, %v400
        %v405 = vcombine.low %v401, %v401
        %406 = vrot.lane.b32.xlu0 %v404, 104
        %v407 = vpop.permute.xlu0 %406
        %408 = vrot.lane.b32.xlu0 %v400, 104
        %v409 = vpop.permute.xlu0 %408
        %410 = vrot.lane.b32.xlu0 %v405, 104
        %v411 = vpop.permute.xlu0 %410
        %412 = vrot.lane.b32.xlu0 %v401, 104
        %v413 = vpop.permute.xlu0 %412
        %vm414 = vcmask 850944
        %v415 = vsel %vm414, %v407, %v409
        %v416 = vsel %vm414, %v409, %v411
        %v417 = vsel %vm414, %v411, %v413
        %421 = vst [vmem:[#allocation2 + $0x60] sm:$0xf0] %v415
        %422 = vst [vmem:[#allocation2 + $0x68] sm:$0xf0] %v416
        %423 = vst [vmem:[#allocation2 + $0x70] sm:$0xf0] %v417
        %v424 = vld [vmem:[%s173] sm:$0xff]
        %v425 = vld [vmem:[%s173 + $0x8] sm:$0xff]
        %v428 = vcombine.high %v424, %v424
        %v429 = vcombine.high %v425, %v425
        %430 = vrot.lane.b32.xlu0 %v424, 103
        %v431 = vpop.permute.xlu0 %430
        %432 = vrot.lane.b32.xlu0 %v428, 103
        %v433 = vpop.permute.xlu0 %432
        %434 = vrot.lane.b32.xlu0 %v425, 103
        %v435 = vpop.permute.xlu0 %434
        %436 = vrot.lane.b32.xlu0 %v429, 103
        %v437 = vpop.permute.xlu0 %436
        %vm438 = vcmask 842752
        %v439 = vsel %vm438, %v431, %v433
        %v440 = vsel %vm438, %v433, %v435
        %v441 = vsel %vm438, %v435, %v437
        %445 = vst [vmem:[#allocation2 + $0x78] sm:$0xf] %v439
        %446 = vst [vmem:[#allocation2 + $0x80] sm:$0xf] %v440
        %447 = vst [vmem:[#allocation2 + $0x88] sm:$0xf] %v441
        %v448 = vld [vmem:[%s173] sm:$0xff]
        %v449 = vld [vmem:[%s173 + $0x8] sm:$0xff]
        %v452 = vcombine.low %v448, %v448
        %v453 = vcombine.low %v449, %v449
        %454 = vrot.lane.b32.xlu0 %v452, 102
        %v455 = vpop.permute.xlu0 %454
        %456 = vrot.lane.b32.xlu0 %v448, 102
        %v457 = vpop.permute.xlu0 %456
        %458 = vrot.lane.b32.xlu0 %v453, 102
        %v459 = vpop.permute.xlu0 %458
        %460 = vrot.lane.b32.xlu0 %v449, 102
        %v461 = vpop.permute.xlu0 %460
        %vm462 = vcmask 834560
        %v463 = vsel %vm462, %v455, %v457
        %v464 = vsel %vm462, %v457, %v459
        %v465 = vsel %vm462, %v459, %v461
        %469 = vst [vmem:[#allocation2 + $0x78] sm:$0xf0] %v463
        %470 = vst [vmem:[#allocation2 + $0x80] sm:$0xf0] %v464
        %471 = vst [vmem:[#allocation2 + $0x88] sm:$0xf0] %v465
        %v472 = vld [vmem:[%s173] sm:$0xff]
        %v473 = vld [vmem:[%s173 + $0x8] sm:$0xff]
        %v476 = vcombine.high %v472, %v472
        %v477 = vcombine.high %v473, %v473
        %478 = vrot.lane.b32.xlu0 %v472, 101
        %v479 = vpop.permute.xlu0 %478
        %480 = vrot.lane.b32.xlu0 %v476, 101
        %v481 = vpop.permute.xlu0 %480
        %482 = vrot.lane.b32.xlu0 %v473, 101
        %v483 = vpop.permute.xlu0 %482
        %484 = vrot.lane.b32.xlu0 %v477, 101
        %v485 = vpop.permute.xlu0 %484
        %vm486 = vcmask 826368
        %v487 = vsel %vm486, %v479, %v481
        %v488 = vsel %vm486, %v481, %v483
        %v489 = vsel %vm486, %v483, %v485
        %493 = vst [vmem:[#allocation2 + $0x90] sm:$0xf] %v487
        %494 = vst [vmem:[#allocation2 + $0x98] sm:$0xf] %v488
        %495 = vst [vmem:[#allocation2 + $0xa0] sm:$0xf] %v489
        %v496 = vld [vmem:[%s173] sm:$0xff]
        %v497 = vld [vmem:[%s173 + $0x8] sm:$0xff]
        %v500 = vcombine.low %v496, %v496
        %v501 = vcombine.low %v497, %v497
        %502 = vrot.lane.b32.xlu0 %v500, 100
        %v503 = vpop.permute.xlu0 %502
        %504 = vrot.lane.b32.xlu0 %v496, 100
        %v505 = vpop.permute.xlu0 %504
        %506 = vrot.lane.b32.xlu0 %v501, 100
        %v507 = vpop.permute.xlu0 %506
        %508 = vrot.lane.b32.xlu0 %v497, 100
        %v509 = vpop.permute.xlu0 %508
        %vm510 = vcmask 818176
        %v511 = vsel %vm510, %v503, %v505
        %v512 = vsel %vm510, %v505, %v507
        %v513 = vsel %vm510, %v507, %v509
        %517 = vst [vmem:[#allocation2 + $0x90] sm:$0xf0] %v511
        %518 = vst [vmem:[#allocation2 + $0x98] sm:$0xf0] %v512
        %519 = vst [vmem:[#allocation2 + $0xa0] sm:$0xf0] %v513
        %v520 = vld [vmem:[%s173] sm:$0xff]
        %v521 = vld [vmem:[%s173 + $0x8] sm:$0xff]
        %v524 = vcombine.high %v520, %v520
        %v525 = vcombine.high %v521, %v521
        %526 = vrot.lane.b32.xlu0 %v520, 84
        %v527 = vpop.permute.xlu0 %526
        %528 = vrot.lane.b32.xlu0 %v524, 84
        %v529 = vpop.permute.xlu0 %528
        %530 = vrot.lane.b32.xlu0 %v521, 84
        %v531 = vpop.permute.xlu0 %530
        %532 = vrot.lane.b32.xlu0 %v525, 84
        %v533 = vpop.permute.xlu0 %532
        %vm534 = vcmask 687104
        %v535 = vsel %vm534, %v527, %v529
        %v536 = vsel %vm534, %v529, %v531
        %v537 = vsel %vm534, %v531, %v533
        %541 = vst [vmem:[#allocation2 + $0xa8] sm:$0xf] %v535
        %542 = vst [vmem:[#allocation2 + $0xb0] sm:$0xf] %v536
        %543 = vst [vmem:[#allocation2 + $0xb8] sm:$0xf] %v537
        %v544 = vld [vmem:[%s173] sm:$0xff]
        %v545 = vld [vmem:[%s173 + $0x8] sm:$0xff]
        %v548 = vcombine.low %v544, %v544
        %v549 = vcombine.low %v545, %v545
        %550 = vrot.lane.b32.xlu0 %v548, 83
        %v551 = vpop.permute.xlu0 %550
        %552 = vrot.lane.b32.xlu0 %v544, 83
        %v553 = vpop.permute.xlu0 %552
        %554 = vrot.lane.b32.xlu0 %v549, 83
        %v555 = vpop.permute.xlu0 %554
        %556 = vrot.lane.b32.xlu0 %v545, 83
        %v557 = vpop.permute.xlu0 %556
        %vm558 = vcmask 678912
        %v559 = vsel %vm558, %v551, %v553
        %v560 = vsel %vm558, %v553, %v555
        %v561 = vsel %vm558, %v555, %v557
        %565 = vst [vmem:[#allocation2 + $0xa8] sm:$0xf0] %v559
        %566 = vst [vmem:[#allocation2 + $0xb0] sm:$0xf0] %v560
        %567 = vst [vmem:[#allocation2 + $0xb8] sm:$0xf0] %v561
        %v568 = vld [vmem:[%s173] sm:$0xff]
        %v569 = vld [vmem:[%s173 + $0x8] sm:$0xff]
        %v572 = vcombine.high %v568, %v568
        %v573 = vcombine.high %v569, %v569
        %574 = vrot.lane.b32.xlu0 %v568, 82
        %v575 = vpop.permute.xlu0 %574
        %576 = vrot.lane.b32.xlu0 %v572, 82
        %v577 = vpop.permute.xlu0 %576
        %578 = vrot.lane.b32.xlu0 %v569, 82
        %v579 = vpop.permute.xlu0 %578
        %580 = vrot.lane.b32.xlu0 %v573, 82
        %v581 = vpop.permute.xlu0 %580
        %vm582 = vcmask 670720
        %v583 = vsel %vm582, %v575, %v577
        %v584 = vsel %vm582, %v577, %v579
        %v585 = vsel %vm582, %v579, %v581
        %589 = vst [vmem:[#allocation2 + $0xc0] sm:$0xf] %v583
        %590 = vst [vmem:[#allocation2 + $0xc8] sm:$0xf] %v584
        %591 = vst [vmem:[#allocation2 + $0xd0] sm:$0xf] %v585
        %v592 = vld [vmem:[%s173] sm:$0xff]
        %v593 = vld [vmem:[%s173 + $0x8] sm:$0xff]
        %v596 = vcombine.low %v592, %v592
        %v597 = vcombine.low %v593, %v593
        %598 = vrot.lane.b32.xlu0 %v596, 81
        %v599 = vpop.permute.xlu0 %598
        %600 = vrot.lane.b32.xlu0 %v592, 81
        %v601 = vpop.permute.xlu0 %600
        %602 = vrot.lane.b32.xlu0 %v597, 81
        %v603 = vpop.permute.xlu0 %602
        %604 = vrot.lane.b32.xlu0 %v593, 81
        %v605 = vpop.permute.xlu0 %604
        %vm606 = vcmask 662528
        %v607 = vsel %vm606, %v599, %v601
        %v608 = vsel %vm606, %v601, %v603
        %v609 = vsel %vm606, %v603, %v605
        %613 = vst [vmem:[#allocation2 + $0xc0] sm:$0xf0] %v607
        %614 = vst [vmem:[#allocation2 + $0xc8] sm:$0xf0] %v608
        %615 = vst [vmem:[#allocation2 + $0xd0] sm:$0xf0] %v609
        %v616 = vld [vmem:[%s173] sm:$0xff]
        %v617 = vld [vmem:[%s173 + $0x8] sm:$0xff]
        %v620 = vcombine.high %v616, %v616
        %v621 = vcombine.high %v617, %v617
        %622 = vrot.lane.b32.xlu0 %v616, 80
        %v623 = vpop.permute.xlu0 %622
        %624 = vrot.lane.b32.xlu0 %v620, 80
        %v625 = vpop.permute.xlu0 %624
        %626 = vrot.lane.b32.xlu0 %v617, 80
        %v627 = vpop.permute.xlu0 %626
        %628 = vrot.lane.b32.xlu0 %v621, 80
        %v629 = vpop.permute.xlu0 %628
        %vm630 = vcmask 654336
        %v631 = vsel %vm630, %v623, %v625
        %v632 = vsel %vm630, %v625, %v627
        %v633 = vsel %vm630, %v627, %v629
        %637 = vst [vmem:[#allocation2 + $0xd8] sm:$0xf] %v631
        %638 = vst [vmem:[#allocation2 + $0xe0] sm:$0xf] %v632
        %639 = vst [vmem:[#allocation2 + $0xe8] sm:$0xf] %v633
        %v640 = vld [vmem:[%s173] sm:$0xff]
        %v641 = vld [vmem:[%s173 + $0x8] sm:$0xff]
        %v644 = vcombine.low %v640, %v640
        %v645 = vcombine.low %v641, %v641
        %646 = vrot.lane.b32.xlu0 %v644, 79
        %v647 = vpop.permute.xlu0 %646
        %648 = vrot.lane.b32.xlu0 %v640, 79
        %v649 = vpop.permute.xlu0 %648
        %650 = vrot.lane.b32.xlu0 %v645, 79
        %v651 = vpop.permute.xlu0 %650
        %652 = vrot.lane.b32.xlu0 %v641, 79
        %v653 = vpop.permute.xlu0 %652
        %vm654 = vcmask 646144
        %v655 = vsel %vm654, %v647, %v649
        %v656 = vsel %vm654, %v649, %v651
        %v657 = vsel %vm654, %v651, %v653
        %661 = vst [vmem:[#allocation2 + $0xd8] sm:$0xf0] %v655
        %662 = vst [vmem:[#allocation2 + $0xe0] sm:$0xf0] %v656
        %663 = vst [vmem:[#allocation2 + $0xe8] sm:$0xf0] %v657
        %v664 = vld [vmem:[%s173] sm:$0xff]
        %v665 = vld [vmem:[%s173 + $0x8] sm:$0xff]
        %v668 = vcombine.high %v664, %v664
        %v669 = vcombine.high %v665, %v665
        %670 = vrot.lane.b32.xlu0 %v664, 78
        %v671 = vpop.permute.xlu0 %670
        %672 = vrot.lane.b32.xlu0 %v668, 78
        %v673 = vpop.permute.xlu0 %672
        %674 = vrot.lane.b32.xlu0 %v665, 78
        %v675 = vpop.permute.xlu0 %674
        %676 = vrot.lane.b32.xlu0 %v669, 78
        %v677 = vpop.permute.xlu0 %676
        %vm678 = vcmask 637952
        %v679 = vsel %vm678, %v671, %v673
        %v680 = vsel %vm678, %v673, %v675
        %v681 = vsel %vm678, %v675, %v677
        %685 = vst [vmem:[#allocation2 + $0xf0] sm:$0xf] %v679
        %686 = vst [vmem:[#allocation2 + $0xf8] sm:$0xf] %v680
        %687 = vst [vmem:[#allocation2 + $0x100] sm:$0xf] %v681
        %v688 = vld [vmem:[%s173] sm:$0xff]
        %v689 = vld [vmem:[%s173 + $0x8] sm:$0xff]
        %v692 = vcombine.low %v688, %v688
        %v693 = vcombine.low %v689, %v689
        %694 = vrot.lane.b32.xlu0 %v692, 62
        %v695 = vpop.permute.xlu0 %694
        %696 = vrot.lane.b32.xlu0 %v688, 62
        %v697 = vpop.permute.xlu0 %696
        %698 = vrot.lane.b32.xlu0 %v693, 62
        %v699 = vpop.permute.xlu0 %698
        %700 = vrot.lane.b32.xlu0 %v689, 62
        %v701 = vpop.permute.xlu0 %700
        %vm702 = vcmask 506880
        %v703 = vsel %vm702, %v695, %v697
        %v704 = vsel %vm702, %v697, %v699
        %v705 = vsel %vm702, %v699, %v701
        %709 = vst [vmem:[#allocation2 + $0xf0] sm:$0xf0] %v703
        %710 = vst [vmem:[#allocation2 + $0xf8] sm:$0xf0] %v704
        %711 = vst [vmem:[#allocation2 + $0x100] sm:$0xf0] %v705
        %v712 = vld [vmem:[%s173] sm:$0xff]
        %v713 = vld [vmem:[%s173 + $0x8] sm:$0xff]
        %v716 = vcombine.high %v712, %v712
        %v717 = vcombine.high %v713, %v713
        %718 = vrot.lane.b32.xlu0 %v712, 61
        %v719 = vpop.permute.xlu0 %718
        %720 = vrot.lane.b32.xlu0 %v716, 61
        %v721 = vpop.permute.xlu0 %720
        %722 = vrot.lane.b32.xlu0 %v713, 61
        %v723 = vpop.permute.xlu0 %722
        %724 = vrot.lane.b32.xlu0 %v717, 61
        %v725 = vpop.permute.xlu0 %724
        %vm726 = vcmask 498688
        %v727 = vsel %vm726, %v719, %v721
        %v728 = vsel %vm726, %v721, %v723
        %v729 = vsel %vm726, %v723, %v725
        %733 = vst [vmem:[#allocation2 + $0x108] sm:$0xf] %v727
        %734 = vst [vmem:[#allocation2 + $0x110] sm:$0xf] %v728
        %735 = vst [vmem:[#allocation2 + $0x118] sm:$0xf] %v729
        %v736 = vld [vmem:[%s173] sm:$0xff]
        %v737 = vld [vmem:[%s173 + $0x8] sm:$0xff]
        %v740 = vcombine.low %v736, %v736
        %v741 = vcombine.low %v737, %v737
        %742 = vrot.lane.b32.xlu0 %v740, 60
        %v743 = vpop.permute.xlu0 %742
        %744 = vrot.lane.b32.xlu0 %v736, 60
        %v745 = vpop.permute.xlu0 %744
        %746 = vrot.lane.b32.xlu0 %v741, 60
        %v747 = vpop.permute.xlu0 %746
        %748 = vrot.lane.b32.xlu0 %v737, 60
        %v749 = vpop.permute.xlu0 %748
        %vm750 = vcmask 490496
        %v751 = vsel %vm750, %v743, %v745
        %v752 = vsel %vm750, %v745, %v747
        %v753 = vsel %vm750, %v747, %v749
        %757 = vst [vmem:[#allocation2 + $0x108] sm:$0xf0] %v751
        %758 = vst [vmem:[#allocation2 + $0x110] sm:$0xf0] %v752
        %759 = vst [vmem:[#allocation2 + $0x118] sm:$0xf0] %v753
        %v760 = vld [vmem:[%s173] sm:$0xff]
        %v761 = vld [vmem:[%s173 + $0x8] sm:$0xff]
        %v764 = vcombine.high %v760, %v760
        %v765 = vcombine.high %v761, %v761
        %766 = vrot.lane.b32.xlu0 %v760, 59
        %v767 = vpop.permute.xlu0 %766
        %768 = vrot.lane.b32.xlu0 %v764, 59
        %v769 = vpop.permute.xlu0 %768
        %770 = vrot.lane.b32.xlu0 %v761, 59
        %v771 = vpop.permute.xlu0 %770
        %772 = vrot.lane.b32.xlu0 %v765, 59
        %v773 = vpop.permute.xlu0 %772
        %vm774 = vcmask 482304
        %v775 = vsel %vm774, %v767, %v769
        %v776 = vsel %vm774, %v769, %v771
        %v777 = vsel %vm774, %v771, %v773
        %781 = vst [vmem:[#allocation2 + $0x120] sm:$0xf] %v775
        %782 = vst [vmem:[#allocation2 + $0x128] sm:$0xf] %v776
        %783 = vst [vmem:[#allocation2 + $0x130] sm:$0xf] %v777
        %v784 = vld [vmem:[%s173] sm:$0xff]
        %v785 = vld [vmem:[%s173 + $0x8] sm:$0xff]
        %v788 = vcombine.low %v784, %v784
        %v789 = vcombine.low %v785, %v785
        %790 = vrot.lane.b32.xlu0 %v788, 58
        %v791 = vpop.permute.xlu0 %790
        %792 = vrot.lane.b32.xlu0 %v784, 58
        %v793 = vpop.permute.xlu0 %792
        %794 = vrot.lane.b32.xlu0 %v789, 58
        %v795 = vpop.permute.xlu0 %794
        %796 = vrot.lane.b32.xlu0 %v785, 58
        %v797 = vpop.permute.xlu0 %796
        %vm798 = vcmask 474112
        %v799 = vsel %vm798, %v791, %v793
        %v800 = vsel %vm798, %v793, %v795
        %v801 = vsel %vm798, %v795, %v797
        %805 = vst [vmem:[#allocation2 + $0x120] sm:$0xf0] %v799
        %806 = vst [vmem:[#allocation2 + $0x128] sm:$0xf0] %v800
        %807 = vst [vmem:[#allocation2 + $0x130] sm:$0xf0] %v801
        %v808 = vld [vmem:[%s173] sm:$0xff]
        %v809 = vld [vmem:[%s173 + $0x8] sm:$0xff]
        %v812 = vcombine.high %v808, %v808
        %v813 = vcombine.high %v809, %v809
        %814 = vrot.lane.b32.xlu0 %v808, 57
        %v815 = vpop.permute.xlu0 %814
        %816 = vrot.lane.b32.xlu0 %v812, 57
        %v817 = vpop.permute.xlu0 %816
        %818 = vrot.lane.b32.xlu0 %v809, 57
        %v819 = vpop.permute.xlu0 %818
        %820 = vrot.lane.b32.xlu0 %v813, 57
        %v821 = vpop.permute.xlu0 %820
        %vm822 = vcmask 465920
        %v823 = vsel %vm822, %v815, %v817
        %v824 = vsel %vm822, %v817, %v819
        %v825 = vsel %vm822, %v819, %v821
        %829 = vst [vmem:[#allocation2 + $0x138] sm:$0xf] %v823
        %830 = vst [vmem:[#allocation2 + $0x140] sm:$0xf] %v824
        %831 = vst [vmem:[#allocation2 + $0x148] sm:$0xf] %v825
        %v832 = vld [vmem:[%s173] sm:$0xff]
        %v833 = vld [vmem:[%s173 + $0x8] sm:$0xff]
        %v836 = vcombine.low %v832, %v832
        %v837 = vcombine.low %v833, %v833
        %838 = vrot.lane.b32.xlu0 %v836, 56
        %v839 = vpop.permute.xlu0 %838
        %840 = vrot.lane.b32.xlu0 %v832, 56
        %v841 = vpop.permute.xlu0 %840
        %842 = vrot.lane.b32.xlu0 %v837, 56
        %v843 = vpop.permute.xlu0 %842
        %844 = vrot.lane.b32.xlu0 %v833, 56
        %v845 = vpop.permute.xlu0 %844
        %vm846 = vcmask 457728
        %v847 = vsel %vm846, %v839, %v841
        %v848 = vsel %vm846, %v841, %v843
        %v849 = vsel %vm846, %v843, %v845
        %853 = vst [vmem:[#allocation2 + $0x138] sm:$0xf0] %v847
        %854 = vst [vmem:[#allocation2 + $0x140] sm:$0xf0] %v848
        %855 = vst [vmem:[#allocation2 + $0x148] sm:$0xf0] %v849
        %v856 = vld [vmem:[%s173] sm:$0xff]
        %v857 = vld [vmem:[%s173 + $0x8] sm:$0xff]
        %v860 = vcombine.high %v856, %v856
        %v861 = vcombine.high %v857, %v857
        %862 = vrot.lane.b32.xlu0 %v856, 40
        %v863 = vpop.permute.xlu0 %862
        %864 = vrot.lane.b32.xlu0 %v860, 40
        %v865 = vpop.permute.xlu0 %864
        %866 = vrot.lane.b32.xlu0 %v857, 40
        %v867 = vpop.permute.xlu0 %866
        %868 = vrot.lane.b32.xlu0 %v861, 40
        %v869 = vpop.permute.xlu0 %868
        %vm870 = vcmask 326656
        %v871 = vsel %vm870, %v863, %v865
        %v872 = vsel %vm870, %v865, %v867
        %v873 = vsel %vm870, %v867, %v869
        %877 = vst [vmem:[#allocation2 + $0x150] sm:$0xf] %v871
        %878 = vst [vmem:[#allocation2 + $0x158] sm:$0xf] %v872
        %879 = vst [vmem:[#allocation2 + $0x160] sm:$0xf] %v873
        %v880 = vld [vmem:[%s173] sm:$0xff]
        %v881 = vld [vmem:[%s173 + $0x8] sm:$0xff]
        %v884 = vcombine.low %v880, %v880
        %v885 = vcombine.low %v881, %v881
        %886 = vrot.lane.b32.xlu0 %v884, 39
        %v887 = vpop.permute.xlu0 %886
        %888 = vrot.lane.b32.xlu0 %v880, 39
        %v889 = vpop.permute.xlu0 %888
        %890 = vrot.lane.b32.xlu0 %v885, 39
        %v891 = vpop.permute.xlu0 %890
        %892 = vrot.lane.b32.xlu0 %v881, 39
        %v893 = vpop.permute.xlu0 %892
        %vm894 = vcmask 318464
        %v895 = vsel %vm894, %v887, %v889
        %v896 = vsel %vm894, %v889, %v891
        %v897 = vsel %vm894, %v891, %v893
        %901 = vst [vmem:[#allocation2 + $0x150] sm:$0xf0] %v895
        %902 = vst [vmem:[#allocation2 + $0x158] sm:$0xf0] %v896
        %903 = vst [vmem:[#allocation2 + $0x160] sm:$0xf0] %v897
        %v904 = vld [vmem:[%s173] sm:$0xff]
        %v905 = vld [vmem:[%s173 + $0x8] sm:$0xff]
        %v908 = vcombine.high %v904, %v904
        %v909 = vcombine.high %v905, %v905
        %910 = vrot.lane.b32.xlu0 %v904, 38
        %v911 = vpop.permute.xlu0 %910
        %912 = vrot.lane.b32.xlu0 %v908, 38
        %v913 = vpop.permute.xlu0 %912
        %914 = vrot.lane.b32.xlu0 %v905, 38
        %v915 = vpop.permute.xlu0 %914
        %916 = vrot.lane.b32.xlu0 %v909, 38
        %v917 = vpop.permute.xlu0 %916
        %vm918 = vcmask 310272
        %v919 = vsel %vm918, %v911, %v913
        %v920 = vsel %vm918, %v913, %v915
        %v921 = vsel %vm918, %v915, %v917
        %925 = vst [vmem:[#allocation2 + $0x168] sm:$0xf] %v919
        %926 = vst [vmem:[#allocation2 + $0x170] sm:$0xf] %v920
        %927 = vst [vmem:[#allocation2 + $0x178] sm:$0xf] %v921
        %v928 = vld [vmem:[%s173] sm:$0xff]
        %v929 = vld [vmem:[%s173 + $0x8] sm:$0xff]
        %v932 = vcombine.low %v928, %v928
        %v933 = vcombine.low %v929, %v929
        %934 = vrot.lane.b32.xlu0 %v932, 37
        %v935 = vpop.permute.xlu0 %934
        %936 = vrot.lane.b32.xlu0 %v928, 37
        %v937 = vpop.permute.xlu0 %936
        %938 = vrot.lane.b32.xlu0 %v933, 37
        %v939 = vpop.permute.xlu0 %938
        %940 = vrot.lane.b32.xlu0 %v929, 37
        %v941 = vpop.permute.xlu0 %940
        %vm942 = vcmask 302080
        %v943 = vsel %vm942, %v935, %v937
        %v944 = vsel %vm942, %v937, %v939
        %v945 = vsel %vm942, %v939, %v941
        %949 = vst [vmem:[#allocation2 + $0x168] sm:$0xf0] %v943
        %950 = vst [vmem:[#allocation2 + $0x170] sm:$0xf0] %v944
        %951 = vst [vmem:[#allocation2 + $0x178] sm:$0xf0] %v945
        %v952 = vld [vmem:[%s173] sm:$0xff]
        %v953 = vld [vmem:[%s173 + $0x8] sm:$0xff]
        %v956 = vcombine.high %v952, %v952
        %v957 = vcombine.high %v953, %v953
        %958 = vrot.lane.b32.xlu0 %v952, 36
        %v959 = vpop.permute.xlu0 %958
        %960 = vrot.lane.b32.xlu0 %v956, 36
        %v961 = vpop.permute.xlu0 %960
        %962 = vrot.lane.b32.xlu0 %v953, 36
        %v963 = vpop.permute.xlu0 %962
        %964 = vrot.lane.b32.xlu0 %v957, 36
        %v965 = vpop.permute.xlu0 %964
        %vm966 = vcmask 293888
        %v967 = vsel %vm966, %v959, %v961
        %v968 = vsel %vm966, %v961, %v963
        %v969 = vsel %vm966, %v963, %v965
        %973 = vst [vmem:[#allocation2 + $0x180] sm:$0xf] %v967
        %974 = vst [vmem:[#allocation2 + $0x188] sm:$0xf] %v968
        %975 = vst [vmem:[#allocation2 + $0x190] sm:$0xf] %v969
        %v976 = vld [vmem:[%s173] sm:$0xff]
        %v977 = vld [vmem:[%s173 + $0x8] sm:$0xff]
        %v980 = vcombine.low %v976, %v976
        %v981 = vcombine.low %v977, %v977
        %982 = vrot.lane.b32.xlu0 %v980, 35
        %v983 = vpop.permute.xlu0 %982
        %984 = vrot.lane.b32.xlu0 %v976, 35
        %v985 = vpop.permute.xlu0 %984
        %986 = vrot.lane.b32.xlu0 %v981, 35
        %v987 = vpop.permute.xlu0 %986
        %988 = vrot.lane.b32.xlu0 %v977, 35
        %v989 = vpop.permute.xlu0 %988
        %vm990 = vcmask 285696
        %v991 = vsel %vm990, %v983, %v985
        %v992 = vsel %vm990, %v985, %v987
        %v993 = vsel %vm990, %v987, %v989
        %997 = vst [vmem:[#allocation2 + $0x180] sm:$0xf0] %v991
        %998 = vst [vmem:[#allocation2 + $0x188] sm:$0xf0] %v992
        %999 = vst [vmem:[#allocation2 + $0x190] sm:$0xf0] %v993
        %v1000 = vld [vmem:[%s173] sm:$0xff]
        %v1001 = vld [vmem:[%s173 + $0x8] sm:$0xff]
        %v1004 = vcombine.high %v1000, %v1000
        %v1005 = vcombine.high %v1001, %v1001
        %1006 = vrot.lane.b32.xlu0 %v1000, 34
        %v1007 = vpop.permute.xlu0 %1006
        %1008 = vrot.lane.b32.xlu0 %v1004, 34
        %v1009 = vpop.permute.xlu0 %1008
        %1010 = vrot.lane.b32.xlu0 %v1001, 34
        %v1011 = vpop.permute.xlu0 %1010
        %1012 = vrot.lane.b32.xlu0 %v1005, 34
        %v1013 = vpop.permute.xlu0 %1012
        %vm1014 = vcmask 277504
        %v1015 = vsel %vm1014, %v1007, %v1009
        %v1016 = vsel %vm1014, %v1009, %v1011
        %v1017 = vsel %vm1014, %v1011, %v1013
        %1021 = vst [vmem:[#allocation2 + $0x198] sm:$0xf] %v1015
        %1022 = vst [vmem:[#allocation2 + $0x1a0] sm:$0xf] %v1016
        %1023 = vst [vmem:[#allocation2 + $0x1a8] sm:$0xf] %v1017
        %v1024 = vld [vmem:[%s173] sm:$0xff]
        %v1025 = vld [vmem:[%s173 + $0x8] sm:$0xff]
        %v1028 = vcombine.low %v1024, %v1024
        %v1029 = vcombine.low %v1025, %v1025
        %1030 = vrot.lane.b32.xlu0 %v1028, 18
        %v1031 = vpop.permute.xlu0 %1030
        %1032 = vrot.lane.b32.xlu0 %v1024, 18
        %v1033 = vpop.permute.xlu0 %1032
        %1034 = vrot.lane.b32.xlu0 %v1029, 18
        %v1035 = vpop.permute.xlu0 %1034
        %1036 = vrot.lane.b32.xlu0 %v1025, 18
        %v1037 = vpop.permute.xlu0 %1036
        %vm1038 = vcmask 146432
        %v1039 = vsel %vm1038, %v1031, %v1033
        %v1040 = vsel %vm1038, %v1033, %v1035
        %v1041 = vsel %vm1038, %v1035, %v1037
        %1045 = vst [vmem:[#allocation2 + $0x198] sm:$0xf0] %v1039
        %1046 = vst [vmem:[#allocation2 + $0x1a0] sm:$0xf0] %v1040
        %1047 = vst [vmem:[#allocation2 + $0x1a8] sm:$0xf0] %v1041
        %v1048 = vld [vmem:[%s173] sm:$0xff]
        %v1049 = vld [vmem:[%s173 + $0x8] sm:$0xff]
        %v1052 = vcombine.high %v1048, %v1048
        %v1053 = vcombine.high %v1049, %v1049
        %1054 = vrot.lane.b32.xlu0 %v1048, 17
        %v1055 = vpop.permute.xlu0 %1054
        %1056 = vrot.lane.b32.xlu0 %v1052, 17
        %v1057 = vpop.permute.xlu0 %1056
        %1058 = vrot.lane.b32.xlu0 %v1049, 17
        %v1059 = vpop.permute.xlu0 %1058
        %1060 = vrot.lane.b32.xlu0 %v1053, 17
        %v1061 = vpop.permute.xlu0 %1060
        %vm1062 = vcmask 138240
        %v1063 = vsel %vm1062, %v1055, %v1057
        %v1064 = vsel %vm1062, %v1057, %v1059
        %v1065 = vsel %vm1062, %v1059, %v1061
        %1069 = vst [vmem:[#allocation2 + $0x1b0] sm:$0xf] %v1063
        %1070 = vst [vmem:[#allocation2 + $0x1b8] sm:$0xf] %v1064
        %1071 = vst [vmem:[#allocation2 + $0x1c0] sm:$0xf] %v1065
        %v1072 = vld [vmem:[%s173] sm:$0xff]
        %v1073 = vld [vmem:[%s173 + $0x8] sm:$0xff]
        %v1076 = vcombine.low %v1072, %v1072
        %v1077 = vcombine.low %v1073, %v1073
        %1078 = vrot.lane.b32.xlu0 %v1076, 16
        %v1079 = vpop.permute.xlu0 %1078
        %1080 = vrot.lane.b32.xlu0 %v1072, 16
        %v1081 = vpop.permute.xlu0 %1080
        %1082 = vrot.lane.b32.xlu0 %v1077, 16
        %v1083 = vpop.permute.xlu0 %1082
        %1084 = vrot.lane.b32.xlu0 %v1073, 16
        %v1085 = vpop.permute.xlu0 %1084
        %vm1086 = vcmask 130048
        %v1087 = vsel %vm1086, %v1079, %v1081
        %v1088 = vsel %vm1086, %v1081, %v1083
        %v1089 = vsel %vm1086, %v1083, %v1085
        %1093 = vst [vmem:[#allocation2 + $0x1b0] sm:$0xf0] %v1087
        %1094 = vst [vmem:[#allocation2 + $0x1b8] sm:$0xf0] %v1088
        %1095 = vst [vmem:[#allocation2 + $0x1c0] sm:$0xf0] %v1089
        %v1096 = vld [vmem:[%s173] sm:$0xff]
        %v1097 = vld [vmem:[%s173 + $0x8] sm:$0xff]
        %v1100 = vcombine.high %v1096, %v1096
        %v1101 = vcombine.high %v1097, %v1097
        %1102 = vrot.lane.b32.xlu0 %v1096, 15
        %v1103 = vpop.permute.xlu0 %1102
        %1104 = vrot.lane.b32.xlu0 %v1100, 15
        %v1105 = vpop.permute.xlu0 %1104
        %1106 = vrot.lane.b32.xlu0 %v1097, 15
        %v1107 = vpop.permute.xlu0 %1106
        %1108 = vrot.lane.b32.xlu0 %v1101, 15
        %v1109 = vpop.permute.xlu0 %1108
        %vm1110 = vcmask 121856
        %v1111 = vsel %vm1110, %v1103, %v1105
        %v1112 = vsel %vm1110, %v1105, %v1107
        %v1113 = vsel %vm1110, %v1107, %v1109
        %1117 = vst [vmem:[#allocation2 + $0x1c8] sm:$0xf] %v1111
        %1118 = vst [vmem:[#allocation2 + $0x1d0] sm:$0xf] %v1112
        %1119 = vst [vmem:[#allocation2 + $0x1d8] sm:$0xf] %v1113
        %v1120 = vld [vmem:[%s173] sm:$0xff]
        %v1121 = vld [vmem:[%s173 + $0x8] sm:$0xff]
        %v1124 = vcombine.low %v1120, %v1120
        %v1125 = vcombine.low %v1121, %v1121
        %1126 = vrot.lane.b32.xlu0 %v1124, 14
        %v1127 = vpop.permute.xlu0 %1126
        %1128 = vrot.lane.b32.xlu0 %v1120, 14
        %v1129 = vpop.permute.xlu0 %1128
        %1130 = vrot.lane.b32.xlu0 %v1125, 14
        %v1131 = vpop.permute.xlu0 %1130
        %1132 = vrot.lane.b32.xlu0 %v1121, 14
        %v1133 = vpop.permute.xlu0 %1132
        %vm1134 = vcmask 113664
        %v1135 = vsel %vm1134, %v1127, %v1129
        %v1136 = vsel %vm1134, %v1129, %v1131
        %v1137 = vsel %vm1134, %v1131, %v1133
        %1141 = vst [vmem:[#allocation2 + $0x1c8] sm:$0xf0] %v1135
        %1142 = vst [vmem:[#allocation2 + $0x1d0] sm:$0xf0] %v1136
        %1143 = vst [vmem:[#allocation2 + $0x1d8] sm:$0xf0] %v1137
        %v1144 = vld [vmem:[%s173] sm:$0xff]
        %v1145 = vld [vmem:[%s173 + $0x8] sm:$0xff]
        %v1148 = vcombine.high %v1144, %v1144
        %v1149 = vcombine.high %v1145, %v1145
        %1150 = vrot.lane.b32.xlu0 %v1144, 13
        %v1151 = vpop.permute.xlu0 %1150
        %1152 = vrot.lane.b32.xlu0 %v1148, 13
        %v1153 = vpop.permute.xlu0 %1152
        %1154 = vrot.lane.b32.xlu0 %v1145, 13
        %v1155 = vpop.permute.xlu0 %1154
        %1156 = vrot.lane.b32.xlu0 %v1149, 13
        %v1157 = vpop.permute.xlu0 %1156
        %vm1158 = vcmask 105472
        %v1159 = vsel %vm1158, %v1151, %v1153
        %v1160 = vsel %vm1158, %v1153, %v1155
        %v1161 = vsel %vm1158, %v1155, %v1157
        %1165 = vst [vmem:[#allocation2 + $0x1e0] sm:$0xf] %v1159
        %1166 = vst [vmem:[#allocation2 + $0x1e8] sm:$0xf] %v1160
        %1167 = vst [vmem:[#allocation2 + $0x1f0] sm:$0xf] %v1161
        %v1168 = vld [vmem:[%s173] sm:$0xff]
        %v1169 = vld [vmem:[%s173 + $0x8] sm:$0xff]
        %v1172 = vcombine.low %v1168, %v1168
        %v1173 = vcombine.low %v1169, %v1169
        %1174 = vrot.lane.b32.xlu0 %v1172, 12
        %v1175 = vpop.permute.xlu0 %1174
        %1176 = vrot.lane.b32.xlu0 %v1168, 12
        %v1177 = vpop.permute.xlu0 %1176
        %1178 = vrot.lane.b32.xlu0 %v1173, 12
        %v1179 = vpop.permute.xlu0 %1178
        %1180 = vrot.lane.b32.xlu0 %v1169, 12
        %v1181 = vpop.permute.xlu0 %1180
        %vm1182 = vcmask 97280
        %v1183 = vsel %vm1182, %v1175, %v1177
        %v1184 = vsel %vm1182, %v1177, %v1179
        %v1185 = vsel %vm1182, %v1179, %v1181
        %1189 = vst [vmem:[#allocation2 + $0x1e0] sm:$0xf0] %v1183
        %1190 = vst [vmem:[#allocation2 + $0x1e8] sm:$0xf0] %v1184
        %1191 = vst [vmem:[#allocation2 + $0x1f0] sm:$0xf0] %v1185
        %v1192 = vld [vmem:[%s173 + $0x4] sm:$0xff]
        %v1193 = vld [vmem:[%s173 + $0xc] sm:$0xff]
        %v1196 = vcombine.high %v1192, %v1192
        %v1197 = vcombine.high %v1193, %v1193
        %1198 = vrot.lane.b32.xlu0 %v1192, 124
        %v1199 = vpop.permute.xlu0 %1198
        %1200 = vrot.lane.b32.xlu0 %v1196, 124
        %v1201 = vpop.permute.xlu0 %1200
        %1202 = vrot.lane.b32.xlu0 %v1193, 124
        %v1203 = vpop.permute.xlu0 %1202
        %1204 = vrot.lane.b32.xlu0 %v1197, 124
        %v1205 = vpop.permute.xlu0 %1204
        %v1206 = vsel %vm294, %v1199, %v1201
        %v1207 = vsel %vm294, %v1201, %v1203
        %v1208 = vsel %vm294, %v1203, %v1205
        %1212 = vst [vmem:[#allocation2 + $0x1f8] sm:$0xf] %v1206
        %1213 = vst [vmem:[#allocation2 + $0x200] sm:$0xf] %v1207
        %1214 = vst [vmem:[#allocation2 + $0x208] sm:$0xf] %v1208
        %v1215 = vld [vmem:[%s173 + $0x4] sm:$0xff]
        %v1216 = vld [vmem:[%s173 + $0xc] sm:$0xff]
        %v1219 = vcombine.low %v1215, %v1215
        %v1220 = vcombine.low %v1216, %v1216
        %1221 = vrot.lane.b32.xlu0 %v1219, 123
        %v1222 = vpop.permute.xlu0 %1221
        %1223 = vrot.lane.b32.xlu0 %v1215, 123
        %v1224 = vpop.permute.xlu0 %1223
        %1225 = vrot.lane.b32.xlu0 %v1220, 123
        %v1226 = vpop.permute.xlu0 %1225
        %1227 = vrot.lane.b32.xlu0 %v1216, 123
        %v1228 = vpop.permute.xlu0 %1227
        %v1229 = vsel %vm318, %v1222, %v1224
        %v1230 = vsel %vm318, %v1224, %v1226
        %v1231 = vsel %vm318, %v1226, %v1228
        %1235 = vst [vmem:[#allocation2 + $0x1f8] sm:$0xf0] %v1229
        %1236 = vst [vmem:[#allocation2 + $0x200] sm:$0xf0] %v1230
        %1237 = vst [vmem:[#allocation2 + $0x208] sm:$0xf0] %v1231
        %v1238 = vld [vmem:[%s173 + $0x4] sm:$0xff]
        %v1239 = vld [vmem:[%s173 + $0xc] sm:$0xff]
        %v1242 = vcombine.high %v1238, %v1238
        %v1243 = vcombine.high %v1239, %v1239
        %1244 = vrot.lane.b32.xlu0 %v1238, 122
        %v1245 = vpop.permute.xlu0 %1244
        %1246 = vrot.lane.b32.xlu0 %v1242, 122
        %v1247 = vpop.permute.xlu0 %1246
        %1248 = vrot.lane.b32.xlu0 %v1239, 122
        %v1249 = vpop.permute.xlu0 %1248
        %1250 = vrot.lane.b32.xlu0 %v1243, 122
        %v1251 = vpop.permute.xlu0 %1250
        %v1252 = vsel %vm342, %v1245, %v1247
        %v1253 = vsel %vm342, %v1247, %v1249
        %v1254 = vsel %vm342, %v1249, %v1251
        %1258 = vst [vmem:[#allocation2 + $0x210] sm:$0xf] %v1252
        %1259 = vst [vmem:[#allocation2 + $0x218] sm:$0xf] %v1253
        %1260 = vst [vmem:[#allocation2 + $0x220] sm:$0xf] %v1254
        %v1261 = vld [vmem:[%s173 + $0x4] sm:$0xff]
        %v1262 = vld [vmem:[%s173 + $0xc] sm:$0xff]
        %v1265 = vcombine.low %v1261, %v1261
        %v1266 = vcombine.low %v1262, %v1262
        %1267 = vrot.lane.b32.xlu0 %v1265, 121
        %v1268 = vpop.permute.xlu0 %1267
        %1269 = vrot.lane.b32.xlu0 %v1261, 121
        %v1270 = vpop.permute.xlu0 %1269
        %1271 = vrot.lane.b32.xlu0 %v1266, 121
        %v1272 = vpop.permute.xlu0 %1271
        %1273 = vrot.lane.b32.xlu0 %v1262, 121
        %v1274 = vpop.permute.xlu0 %1273
        %vm1275 = vcmask 990208
        %v1276 = vsel %vm1275, %v1268, %v1270
        %v1277 = vsel %vm1275, %v1270, %v1272
        %v1278 = vsel %vm1275, %v1272, %v1274
        %1282 = vst [vmem:[#allocation2 + $0x210] sm:$0xf0] %v1276
        %1283 = vst [vmem:[#allocation2 + $0x218] sm:$0xf0] %v1277
        %1284 = vst [vmem:[#allocation2 + $0x220] sm:$0xf0] %v1278
        %v1285 = vld [vmem:[%s173 + $0x4] sm:$0xff]
        %v1286 = vld [vmem:[%s173 + $0xc] sm:$0xff]
        %v1289 = vcombine.high %v1285, %v1285
        %v1290 = vcombine.high %v1286, %v1286
        %1291 = vrot.lane.b32.xlu0 %v1285, 120
        %v1292 = vpop.permute.xlu0 %1291
        %1293 = vrot.lane.b32.xlu0 %v1289, 120
        %v1294 = vpop.permute.xlu0 %1293
        %1295 = vrot.lane.b32.xlu0 %v1286, 120
        %v1296 = vpop.permute.xlu0 %1295
        %1297 = vrot.lane.b32.xlu0 %v1290, 120
        %v1298 = vpop.permute.xlu0 %1297
        %vm1299 = vcmask 982016
        %v1300 = vsel %vm1299, %v1292, %v1294
        %v1301 = vsel %vm1299, %v1294, %v1296
        %v1302 = vsel %vm1299, %v1296, %v1298
        %1306 = vst [vmem:[#allocation2 + $0x228] sm:$0xf] %v1300
        %1307 = vst [vmem:[#allocation2 + $0x230] sm:$0xf] %v1301
        %1308 = vst [vmem:[#allocation2 + $0x238] sm:$0xf] %v1302
        %v1309 = vld [vmem:[%s173 + $0x4] sm:$0xff]
        %v1310 = vld [vmem:[%s173 + $0xc] sm:$0xff]
        %v1313 = vcombine.low %v1309, %v1309
        %v1314 = vcombine.low %v1310, %v1310
        %1315 = vrot.lane.b32.xlu0 %v1313, 119
        %v1316 = vpop.permute.xlu0 %1315
        %1317 = vrot.lane.b32.xlu0 %v1309, 119
        %v1318 = vpop.permute.xlu0 %1317
        %1319 = vrot.lane.b32.xlu0 %v1314, 119
        %v1320 = vpop.permute.xlu0 %1319
        %1321 = vrot.lane.b32.xlu0 %v1310, 119
        %v1322 = vpop.permute.xlu0 %1321
        %vm1323 = vcmask 973824
        %v1324 = vsel %vm1323, %v1316, %v1318
        %v1325 = vsel %vm1323, %v1318, %v1320
        %v1326 = vsel %vm1323, %v1320, %v1322
        %1330 = vst [vmem:[#allocation2 + $0x228] sm:$0xf0] %v1324
        %1331 = vst [vmem:[#allocation2 + $0x230] sm:$0xf0] %v1325
        %1332 = vst [vmem:[#allocation2 + $0x238] sm:$0xf0] %v1326
        %v1333 = vld [vmem:[%s173 + $0x4] sm:$0xff]
        %v1334 = vld [vmem:[%s173 + $0xc] sm:$0xff]
        %v1337 = vcombine.high %v1333, %v1333
        %v1338 = vcombine.high %v1334, %v1334
        %1339 = vrot.lane.b32.xlu0 %v1333, 118
        %v1340 = vpop.permute.xlu0 %1339
        %1341 = vrot.lane.b32.xlu0 %v1337, 118
        %v1342 = vpop.permute.xlu0 %1341
        %1343 = vrot.lane.b32.xlu0 %v1334, 118
        %v1344 = vpop.permute.xlu0 %1343
        %1345 = vrot.lane.b32.xlu0 %v1338, 118
        %v1346 = vpop.permute.xlu0 %1345
        %vm1347 = vcmask 965632
        %v1348 = vsel %vm1347, %v1340, %v1342
        %v1349 = vsel %vm1347, %v1342, %v1344
        %v1350 = vsel %vm1347, %v1344, %v1346
        %1354 = vst [vmem:[#allocation2 + $0x240] sm:$0xf] %v1348
        %1355 = vst [vmem:[#allocation2 + $0x248] sm:$0xf] %v1349
        %1356 = vst [vmem:[#allocation2 + $0x250] sm:$0xf] %v1350
        %v1357 = vld [vmem:[#allocation6] sm:$0xff]
        %v1358 = vld [vmem:[#allocation6 + $0x8] sm:$0xff]
        %v1359 = vld [vmem:[#allocation2] sm:$0xff]
        %v1360 = vld [vmem:[#allocation2 + $0x8] sm:$0xff]
        %v1361 = vld [vmem:[#allocation2 + $0x10] sm:$0xff]
        %v1362 = vld [vmem:[#allocation2 + $0x18] sm:$0xff]
        %v1363 = vld [vmem:[#allocation2 + $0x20] sm:$0xff]
        %v1364 = vld [vmem:[#allocation2 + $0x28] sm:$0xff]
        %v1365 = vld [vmem:[#allocation2 + $0x30] sm:$0xff]
        %v1366 = vld [vmem:[#allocation2 + $0x38] sm:$0xff]
        %v1367 = vld [vmem:[#allocation2 + $0x40] sm:$0xff]
        %v1368 = vld [vmem:[#allocation2 + $0x48] sm:$0xff]
        %v1369 = vld [vmem:[#allocation2 + $0x50] sm:$0xff]
        %v1370 = vld [vmem:[#allocation2 + $0x58] sm:$0xff]
        %v1371 = vld [vmem:[#allocation2 + $0x60] sm:$0xff]
        %v1372 = vld [vmem:[#allocation2 + $0x68] sm:$0xff]
        %v1373 = vld [vmem:[#allocation2 + $0x70] sm:$0xff]
        %v1374 = vld [vmem:[#allocation2 + $0x78] sm:$0xff]
        %v1375 = vld [vmem:[#allocation2 + $0x80] sm:$0xff]
        %v1376 = vld [vmem:[#allocation2 + $0x88] sm:$0xff]
        %v1377 = vld [vmem:[#allocation2 + $0x90] sm:$0xff]
        %v1378 = vld [vmem:[#allocation2 + $0x98] sm:$0xff]
        %v1379 = vld [vmem:[#allocation2 + $0xa0] sm:$0xff]
        %v1380 = vld [vmem:[#allocation2 + $0xa8] sm:$0xff]
        %v1381 = vld [vmem:[#allocation2 + $0xb0] sm:$0xff]
        %v1382 = vld [vmem:[#allocation2 + $0xb8] sm:$0xff]
        %v1383 = vld [vmem:[#allocation2 + $0xc0] sm:$0xff]
        %v1384 = vld [vmem:[#allocation2 + $0xc8] sm:$0xff]
        %v1385 = vld [vmem:[#allocation2 + $0xd0] sm:$0xff]
        %v1386 = vld [vmem:[#allocation2 + $0xd8] sm:$0xff]
        %v1387 = vld [vmem:[#allocation2 + $0xe0] sm:$0xff]
        %v1388 = vld [vmem:[#allocation2 + $0xe8] sm:$0xff]
        %v1389 = vld [vmem:[#allocation2 + $0xf0] sm:$0xff]
        %v1390 = vld [vmem:[#allocation2 + $0xf8] sm:$0xff]
        %v1391 = vld [vmem:[#allocation2 + $0x100] sm:$0xff]
        %v1392 = vld [vmem:[#allocation2 + $0x108] sm:$0xff]
        %v1393 = vld [vmem:[#allocation2 + $0x110] sm:$0xff]
        %v1394 = vld [vmem:[#allocation2 + $0x118] sm:$0xff]
        %v1395 = vld [vmem:[#allocation2 + $0x120] sm:$0xff]
        %v1396 = vld [vmem:[#allocation2 + $0x128] sm:$0xff]
        %v1397 = vld [vmem:[#allocation2 + $0x130] sm:$0xff]
        %v1398 = vld [vmem:[#allocation2 + $0x138] sm:$0xff]
        %v1399 = vld [vmem:[#allocation2 + $0x140] sm:$0xff]
        %v1400 = vld [vmem:[#allocation2 + $0x148] sm:$0xff]
        %v1401 = vld [vmem:[#allocation2 + $0x150] sm:$0xff]
        %v1402 = vld [vmem:[#allocation2 + $0x158] sm:$0xff]
        %v1403 = vld [vmem:[#allocation2 + $0x160] sm:$0xff]
        %v1404 = vld [vmem:[#allocation2 + $0x168] sm:$0xff]
        %v1405 = vld [vmem:[#allocation2 + $0x170] sm:$0xff]
        %v1406 = vld [vmem:[#allocation2 + $0x178] sm:$0xff]
        %v1407 = vld [vmem:[#allocation2 + $0x180] sm:$0xff]
        %v1408 = vld [vmem:[#allocation2 + $0x188] sm:$0xff]
        %v1409 = vld [vmem:[#allocation2 + $0x190] sm:$0xff]
        %v1410 = vld [vmem:[#allocation2 + $0x198] sm:$0xff]
        %v1411 = vld [vmem:[#allocation2 + $0x1a0] sm:$0xff]
        %v1412 = vld [vmem:[#allocation2 + $0x1a8] sm:$0xff]
        %v1413 = vld [vmem:[#allocation2 + $0x1b0] sm:$0xff]
        %v1414 = vld [vmem:[#allocation2 + $0x1b8] sm:$0xff]
        %v1415 = vld [vmem:[#allocation2 + $0x1c0] sm:$0xff]
        %v1416 = vld [vmem:[#allocation2 + $0x1c8] sm:$0xff]
        %v1417 = vld [vmem:[#allocation2 + $0x1d0] sm:$0xff]
        %v1418 = vld [vmem:[#allocation2 + $0x1d8] sm:$0xff]
        %v1419 = vld [vmem:[#allocation2 + $0x1e0] sm:$0xff]
        %v1420 = vld [vmem:[#allocation2 + $0x1e8] sm:$0xff]
        %v1421 = vld [vmem:[#allocation2 + $0x1f0] sm:$0xff]
        %v1422 = vld [vmem:[#allocation2 + $0x1f8] sm:$0xff]
        %v1423 = vld [vmem:[#allocation2 + $0x200] sm:$0xff]
        %v1424 = vld [vmem:[#allocation2 + $0x208] sm:$0xff]
        %v1425 = vld [vmem:[#allocation2 + $0x210] sm:$0xff]
        %v1426 = vld [vmem:[#allocation2 + $0x218] sm:$0xff]
        %v1427 = vld [vmem:[#allocation2 + $0x220] sm:$0xff]
        %v1428 = vld [vmem:[#allocation2 + $0x228] sm:$0xff]
        %v1429 = vld [vmem:[#allocation2 + $0x230] sm:$0xff]
        %v1430 = vld [vmem:[#allocation2 + $0x238] sm:$0xff]
        %v1431 = vld [vmem:[#allocation2 + $0x240] sm:$0xf]
        %v1432 = vld [vmem:[#allocation2 + $0x248] sm:$0xf]
        %v1433 = vld [vmem:[#allocation2 + $0x250] sm:$0xf]
        %v1434 = vld [vmem:[%s2] sm:$0xff]
        %1436 = vset.pattern.permute.xlu0 0
        %1437 = vperm.xlu0 %1436, %v1434
        %v1438 = vpop.permute.xlu0 %1437
        %vm1440 = vcmask 556032
        %v1442 = vsel %vm1440, %v1358, 0
        %vm1444 = vcmask 1043456
        %v1446 = vsel %vm1444, %v1431, 0
        %v1449 = vsel %vm1444, %v1432, 0
        %v1452 = vsel %vm1444, %v1433, 0
        %1454 = vmatprep.subr.mxu0 %v1360
        %1455 = vmatpush1.msra.mxu0 %v1359
        %1456 = vmatprep.subr.mxu0 %v1363
        %1457 = vmatpush1.msra.mxu0 %v1362
        %1458 = vmatprep.subr.mxu0 %v1366
        %1459 = vmatpush1.msra.mxu0 %v1365
        %1460 = vmatprep.subr.mxu0 %v1369
        %1461 = vmatpush1.msra.mxu0 %v1368
        %1462 = vmatprep.subr.mxu0 %v1372
        %1463 = vmatpush1.msra.mxu0 %v1371
        %1464 = vmatprep.subr.mxu0 %v1375
        %1465 = vmatpush1.msra.mxu0 %v1374
        %1466 = vmatprep.subr.mxu0 %v1378
        %1467 = vmatpush1.msra.mxu0 %v1377
        %1468 = vmatprep.subr.mxu0 %v1381
        %1469 = vmatpush1.msra.mxu0 %v1380
        %1470 = vmatprep.subr.mxu0 %v1384
        %1471 = vmatpush1.msra.mxu0 %v1383
        %1472 = vmatprep.subr.mxu0 %v1387
        %1473 = vmatpush1.msra.mxu0 %v1386
        %1474 = vmatprep.subr.mxu0 %v1390
        %1475 = vmatpush1.msra.mxu0 %v1389
        %1476 = vmatprep.subr.mxu0 %v1393
        %1477 = vmatpush1.msra.mxu0 %v1392
        %1478 = vmatprep.subr.mxu0 %v1396
        %1479 = vmatpush1.msra.mxu0 %v1395
        %1480 = vmatprep.subr.mxu0 %v1399
        %1481 = vmatpush1.msra.mxu0 %v1398
        %1482 = vmatprep.subr.mxu0 %v1402
        %1483 = vmatpush1.msra.mxu0 %v1401
        %1484 = vmatprep.subr.mxu0 %v1405
        %1485 = vmatpush1.msra.mxu0 %v1404
        %1486 = vmatprep.subr.mxu0 %v1408
        %1487 = vmatpush1.msra.mxu0 %v1407
        %1488 = vmatprep.subr.mxu0 %v1411
        %1489 = vmatpush1.msra.mxu0 %v1410
        %1490 = vmatprep.subr.mxu0 %v1414
        %1491 = vmatpush1.msra.mxu0 %v1413
        %1492 = vmatprep.subr.mxu0 %v1417
        %1493 = vmatpush1.msra.mxu0 %v1416
        %1494 = vmatprep.subr.mxu0 %v1420
        %1495 = vmatpush1.msra.mxu0 %v1419
        %1496 = vmatprep.subr.mxu0 %v1423
        %1497 = vmatpush1.msra.mxu0 %v1422
        %1498 = vmatprep.subr.mxu0 %v1426
        %1499 = vmatpush1.msra.mxu0 %v1425
        %1500 = vmatprep.subr.mxu0 %v1429
        %1501 = vmatpush1.msra.mxu0 %v1428
        %1502 = vmatprep.subr.mxu0 %v1449
        %1503 = vmatpush1.msra.mxu0 %v1446
        %1504 = vmatprep.subr.mxu0 0.0
        %1505 = vmatpush1.msra.mxu0 0.0
        %1506 = vmatprep.subr.mxu0 0.0
        %1507 = vmatpush1.msra.mxu0 0.0
        %1508 = vmatprep.subr.mxu0 0.0
        %1509 = vmatpush1.msra.mxu0 0.0
        %1510 = vmatprep.subr.mxu0 0.0
        %1511 = vmatpush1.msra.mxu0 0.0
        %1512 = vmatprep.subr.mxu0 0.0
        %1513 = vmatpush1.msra.mxu0 0.0
        %1514 = vmatprep.subr.mxu0 0.0
        %1515 = vmatpush1.msra.mxu0 0.0
        %1516 = vmatprep.subr.mxu0 0.0
        %1517 = vmatpush1.msra.mxu0 0.0
        %1518 = vmatprep.mubr.f32.mxu0 %v1442
        %1519 = vmatmul.mubr.f32.gmra.mrb[0].mxu0 %v1357
        %v1520 = vpop.f32.mrb[0].mxu0
        %v1521 = vadd.f32 %v1438, %v1520
        %v1522 = vpop.f32.mrb[0].mxu0
        %v1523 = vadd.f32 %v1438, %v1522
        %1524 = vdwg.mxu0
        %1525 = vmatprep.subr.mxu0 0.0
        %1526 = vmatpush1.msra.mxu0 %v1361
        %1527 = vmatprep.subr.mxu0 0.0
        %1528 = vmatpush1.msra.mxu0 %v1364
        %1529 = vmatprep.subr.mxu0 0.0
        %1530 = vmatpush1.msra.mxu0 %v1367
        %1531 = vmatprep.subr.mxu0 0.0
        %1532 = vmatpush1.msra.mxu0 %v1370
        %1533 = vmatprep.subr.mxu0 0.0
        %1534 = vmatpush1.msra.mxu0 %v1373
        %1535 = vmatprep.subr.mxu0 0.0
        %1536 = vmatpush1.msra.mxu0 %v1376
        %1537 = vmatprep.subr.mxu0 0.0
        %1538 = vmatpush1.msra.mxu0 %v1379
        %1539 = vmatprep.subr.mxu0 0.0
        %1540 = vmatpush1.msra.mxu0 %v1382
        %1541 = vmatprep.subr.mxu0 0.0
        %1542 = vmatpush1.msra.mxu0 %v1385
        %1543 = vmatprep.subr.mxu0 0.0
        %1544 = vmatpush1.msra.mxu0 %v1388
        %1545 = vmatprep.subr.mxu0 0.0
        %1546 = vmatpush1.msra.mxu0 %v1391
        %1547 = vmatprep.subr.mxu0 0.0
        %1548 = vmatpush1.msra.mxu0 %v1394
        %1549 = vmatprep.subr.mxu0 0.0
        %1550 = vmatpush1.msra.mxu0 %v1397
        %1551 = vmatprep.subr.mxu0 0.0
        %1552 = vmatpush1.msra.mxu0 %v1400
        %1553 = vmatprep.subr.mxu0 0.0
        %1554 = vmatpush1.msra.mxu0 %v1403
        %1555 = vmatprep.subr.mxu0 0.0
        %1556 = vmatpush1.msra.mxu0 %v1406
        %1557 = vmatprep.subr.mxu0 0.0
        %1558 = vmatpush1.msra.mxu0 %v1409
        %1559 = vmatprep.subr.mxu0 0.0
        %1560 = vmatpush1.msra.mxu0 %v1412
        %1561 = vmatprep.subr.mxu0 0.0
        %1562 = vmatpush1.msra.mxu0 %v1415
        %1563 = vmatprep.subr.mxu0 0.0
        %1564 = vmatpush1.msra.mxu0 %v1418
        %1565 = vmatprep.subr.mxu0 0.0
        %1566 = vmatpush1.msra.mxu0 %v1421
        %1567 = vmatprep.subr.mxu0 0.0
        %1568 = vmatpush1.msra.mxu0 %v1424
        %1569 = vmatprep.subr.mxu0 0.0
        %1570 = vmatpush1.msra.mxu0 %v1427
        %1571 = vmatprep.subr.mxu0 0.0
        %1572 = vmatpush1.msra.mxu0 %v1430
        %1573 = vmatprep.subr.mxu0 0.0
        %1574 = vmatpush1.msra.mxu0 %v1452
        %1575 = vmatprep.subr.mxu0 0.0
        %1576 = vmatpush1.msra.mxu0 0.0
        %1577 = vmatprep.subr.mxu0 0.0
        %1578 = vmatpush1.msra.mxu0 0.0
        %1579 = vmatprep.subr.mxu0 0.0
        %1580 = vmatpush1.msra.mxu0 0.0
        %1581 = vmatprep.subr.mxu0 0.0
        %1582 = vmatpush1.msra.mxu0 0.0
        %1583 = vmatprep.subr.mxu0 0.0
        %1584 = vmatpush1.msra.mxu0 0.0
        %1585 = vmatprep.subr.mxu0 0.0
        %1586 = vmatpush1.msra.mxu0 0.0
        %1587 = vmatprep.subr.mxu0 0.0
        %1588 = vmatpush1.msra.mxu0 0.0
        %1589 = vmatprep.mubr.f32.mxu0 %v1442
        %1590 = vmatmul.mubr.f32.gmra.mrb[0].mxu0 %v1357
        %v1591 = vpop.f32.mrb[0].mxu0
        %v1592 = vadd.f32 %v1438, %v1591
        %v1593 = vpop.f32.mrb[0].mxu0
        %1594 = vdwg.mxu0
        %v1595 = vxor.u32 %v1521, 2147483648
        %v1596 = vxor.u32 %v1523, 2147483648
        %v1597 = vxor.u32 %v1592, 2147483648
        %v1598 = vmul.f32 %v1595, 1.442695
        %v1599 = vpow.pop %v1598
        %v1600 = vmul.f32 %v1596, 1.442695
        %v1601 = vpow.pop %v1600
        %v1602 = vmul.f32 %v1597, 1.442695
        %v1603 = vpow.pop %v1602
        %v1604 = vadd.f32 %v1599, 1.0
        %v1605 = vadd.f32 %v1601, 1.0
        %v1606 = vadd.f32 %v1603, 1.0
        %v1607 = vrcp.pop %v1604
        %v1608 = vmul.f32 1.0, %v1607
        %v1609 = vrcp.pop %v1605
        %v1610 = vmul.f32 1.0, %v1609
        %v1611 = vrcp.pop %v1606
        %v1612 = vmul.f32 1.0, %v1611
        %v1616 = vrot.slane %v1608, 4
        %v1617 = vrot.slane %v1610, 4
        %v1618 = vrot.slane %v1612, 4
        %v1622 = vmul.f32 %v1521, %v1616
        %v1623 = vmul.f32 %v1523, %v1617
        %v1624 = vmul.f32 %v1592, %v1618
        %v1627 = vcombine.low %v1622, %v1623
        %1629 = vst [vmem:[%s199] sm:$0xff] %v1627
        %1630 = vst [vmem:[%s199 + $0x8] sm:$0xf] %v1624
        %s1631 = sand.u32 %s97, 1
        %s1632 = scalar_lea.sflag [#allocation5], %s1631
        %s1633 = sand.u32 %s97, 1
        %s1634 = smul.addr %s1633, 12
        %s1635 = scalar_lea.vmem [#allocation8], %s1634
        // Predicated region
        $region41: #{tpu_custom_call.1} parent=31 // pred_check
          %p1636 = pneg %p107
        $region42: #{tpu_custom_call.1} parent=31 // pred_check_branch
          %1638 = sbr.rel (%p1636) target = $region44
        $region43: #{tpu_custom_call.1} parent=31 // pred_region
          %s1640 = ssub.s32 192, 192
          %1641 = vsyncadd %s1632, %s1640
          %s1642 = smul.addr %s21, 3
          %s1643 = smul.addr %s1642, 64
          %s1644 = scalar_lea.hbm %s3, %s1643
          %s1646 = sshll.u32 %s1635, 4
          %s1647 = int_to_ptr.vmem [resolvable:$true] %s1646
          %1649 = dma.vmem_to_hbm [thread:$0]  %s1647, 192, %s1644, %s1632
        $region44: #{tpu_custom_call.1} parent=31 // pred_fallthru
          _
      $region32: #{tpu_custom_call.1} parent=5 // pred_fallthru
        _
      %p1650 = scmp.le.s32.totalorder 2, %s16
      // Predicated region
      $region45: #{tpu_custom_call.1} parent=5 // pred_check
        %p1651 = pneg %p1650
      $region46: #{tpu_custom_call.1} parent=5 // pred_check_branch
        %1653 = sbr.rel (%p1651) target = $region48
      $region47: #{tpu_custom_call.1} parent=5 // pred_region
        %s1654 = ssub.s32 %s16, 2
        // Predicated region
        $region49: #{tpu_custom_call.1} parent=47 // pred_check
          %p1655 = pneg %p113
        $region50: #{tpu_custom_call.1} parent=47 // pred_check_branch
          %1657 = sbr.rel (%p1655) target = $region52
        $region51: #{tpu_custom_call.1} parent=47 // pred_region
          %s1658 = sand.u32 %s98, 1
          %s1659 = scalar_lea.sflag [#allocation5], %s1658
          %s1660 = sand.u32 %s98, 1
          %s1661 = smul.addr %s1660, 12
          %s1662 = scalar_lea.vmem [#allocation8], %s1661
          %1663 = dma.done %s1659, 192
        $region52: #{tpu_custom_call.1} parent=47 // pred_fallthru
          _
      $region48: #{tpu_custom_call.1} parent=5 // pred_fallthru
        _
    $region6: #{tpu_custom_call.1} parent=1 // loop_footer
      %s20 = sadd.s32 1, %s16
    $region7: #{tpu_custom_call.1} parent=1 // loop_footer_branch
      %15 = sbr.rel target = $region3
    $region8: #{tpu_custom_call.1} parent=1 // loop_exit
      _
    %1664 = vsyncpa [#allocation4], 1
    %s1665 = scalar_lea.sflag [#allocation4], 1
    %1666 = vsyncpa %s1665, 1
    %1667 = vsyncpa [#allocation7], 1
    %1668 = vsyncpa [#allocation5], 1
    %s1669 = scalar_lea.sflag [#allocation5], 1
    %1670 = vsyncpa %s1669, 1

</llo_original>
